<compile_context>
chip_gen: v6e
topology: v6e:2x2x1
jax: 0.10.0
libtpu: 0.0.40
codegen_flags: <defaults>
</compile_context>

<pallas_src>
import numpy as np
import jax
import jax.numpy as jnp
from jax import lax
from jax.experimental import pallas as pl
from jax.experimental.pallas import tpu as pltpu

NEG_LARGE = -1e30   # stands in for -inf in the max-pool halo (avoids inf/NaN)


def _shift_lanes(v, s):
    """out[:, q] = v[:, (q + off) % P], with s = (-off) % P precomputed."""
    return v if s == 0 else pltpu.roll(v, s, 1)


def _make_kernel(n1, c2, c5, n3, n5, npl, shifts3, shifts5):
    def kernel(x_ref, mask_ref, hneg_ref,
               wred_ref, bred_ref,
               w3_ref, b3_ref,
               w5_ref, b5_ref,
               wp_ref, bp_ref,
               o_ref):
        x = x_ref[0]              # (Cin, P) zero-padded (pad=2) flattened grid
        mask = mask_ref[...]      # (1, P): 1.0 on interior, 0.0 on halo/tail

        # ---- fused 1x1 convs (branch-1 + 3x3-reduce + 5x5-reduce): 1 MXU push
        r_all = jnp.maximum(
            jnp.dot(wred_ref[...], x, preferred_element_type=jnp.float32)
            + bred_ref[...], 0.0) * mask            # halo exactly zero
        y1 = r_all[0:n1, :]
        r2 = r_all[n1:n1 + c2, :]
        r3 = r_all[n1 + c2:n1 + c2 + c5, :]

        # ---- branch 2: 3x3 conv (pad=1) — one stacked matmul + rolled taps
        u3 = jnp.dot(w3_ref[...], r2,
                     preferred_element_type=jnp.float32)   # (9*n3, P)
        acc2 = b3_ref[...]
        for t, s in enumerate(shifts3):
            acc2 = acc2 + _shift_lanes(u3[t * n3:(t + 1) * n3, :], s)
        y2 = jnp.maximum(acc2, 0.0)

        # ---- branch 3: 5x5 conv (pad=2) — same scheme, 25 taps
        u5 = jnp.dot(w5_ref[...], r3,
                     preferred_element_type=jnp.float32)   # (25*n5, P)
        acc3 = b5_ref[...]
        for t, s in enumerate(shifts5):
            acc3 = acc3 + _shift_lanes(u5[t * n5:(t + 1) * n5, :], s)
        y3 = jnp.maximum(acc3, 0.0)

        # ---- branch 4: 3x3 max-pool (stride 1, pad=1, -inf halo) + 1x1 conv
        xp = x + hneg_ref[...]                 # additive -inf-like halo mask
        pooled = xp
        for s in shifts3:                      # same 3x3 window offsets
            if s != 0:
                pooled = jnp.maximum(pooled, _shift_lanes(xp, s))
        y4 = jnp.maximum(
            jnp.dot(wp_ref[...], pooled, preferred_element_type=jnp.float32)
            + bp_ref[...], 0.0)

        # ---- lane-dense, sublane-aligned direct stores (no concat copy)
        o_ref[0, 0:n1, :] = y1
        o_ref[0, n1:n1 + n3, :] = y2
        o_ref[0, n1 + n3:n1 + n3 + n5, :] = y3
        o_ref[0, n1 + n3 + n5:n1 + n3 + n5 + npl, :] = y4

    return kernel


def inception_block_pallas(x_nchw, p):
    N, Cin, H, W = x_nchw.shape
    n1 = p['w1'].shape[0]
    c2 = p['w2r'].shape[0]
    c5 = p['w5r'].shape[0]
    n3 = p['w3'].shape[0]
    n5 = p['w5'].shape[0]
    npl = p['wp'].shape[0]
    # PyTorch module wires the 3x3/5x5 convs with `in_channels` inputs:
    assert p['w3'].shape[1] == c2 and p['w5'].shape[1] == c5, \
        "module only runs when n3x3red == in_channels == n5x5red"
    Ctot = n1 + n3 + n5 + npl

    Hp, Wp = H + 4, W + 4
    S = Hp * Wp
    P = ((S + 127) // 128) * 128          # lane-pad flattened spatial to x128

    # input: NCHW -> zero-pad spatial by 2 -> flatten spatial onto lanes
    x = x_nchw.astype(jnp.float32)
    xpad = jnp.pad(x, ((0, 0), (0, 0), (2, 2), (2, 2)))
    x_flat = jnp.pad(xpad.reshape(N, Cin, S), ((0, 0), (0, 0), (0, P - S)))

    # host-side masks: interior indicator + additive -inf-ish halo for the pool
    m = np.zeros((Hp, Wp), np.float32)
    m[2:2 + H, 2:2 + W] = 1.0
    m_flat = np.zeros((1, P), np.float32)
    m_flat[0, :S] = m.reshape(-1)
    hneg = ((1.0 - m_flat) * NEG_LARGE).astype(np.float32)
    mask = jnp.asarray(m_flat)
    hneg = jnp.asarray(hneg)

    # weights: fuse the three x-reading 1x1 convs; stack 3x3/5x5 taps on Cout
    wred = jnp.concatenate([p['w1'][:, :, 0, 0], p['w2r'][:, :, 0, 0],
                            p['w5r'][:, :, 0, 0]], axis=0)          # (n1+c2+c5, Cin)
    bred = jnp.concatenate([p['b1'], p['b2r'], p['b5r']])[:, None]
    w3s = jnp.transpose(p['w3'], (2, 3, 0, 1)).reshape(9 * n3, c2)  # rows: (ky,kx,n)
    w5s = jnp.transpose(p['w5'], (2, 3, 0, 1)).reshape(25 * n5, c5)
    b3c, b5c = p['b3'][:, None], p['b5'][:, None]
    wpm, bpc = p['wp'][:, :, 0, 0], p['bp'][:, None]

    # static lane shifts per conv tap: out[:, q] needs in[:, q + off]
    shifts3 = [(-((ky - 1) * Wp + (kx - 1))) % P
               for ky in range(3) for kx in range(3)]
    shifts5 = [(-((ky - 2) * Wp + (kx - 2))) % P
               for ky in range(5) for kx in range(5)]

    kernel = _make_kernel(n1, c2, c5, n3, n5, npl, shifts3, shifts5)

    args = (x_flat, mask, hneg, wred, bred, w3s, b3c, w5s, b5c, wpm, bpc)

    def bcast_spec(a):
        nd = a.ndim
        return pl.BlockSpec(a.shape, lambda n, _nd=nd: (0,) * _nd)

    in_specs = [pl.BlockSpec((1, Cin, P), lambda n: (n, 0, 0))]
    in_specs += [bcast_spec(a) for a in args[1:]]

    out_flat = pl.pallas_call(
        kernel,
        out_shape=jax.ShapeDtypeStruct((N, Ctot, P), jnp.float32),
        grid=(N,),                 # one batch element / step; keeps 2 parallel
                                   # steps so both v7x TensorCores are used
        in_specs=in_specs,
        out_specs=pl.BlockSpec((1, Ctot, P), lambda n: (n, 0, 0)),
        compiler_params=pltpu.CompilerParams(
            dimension_semantics=("parallel",)),
    )(*args)

    # un-flatten: drop lane tail + pad-2 halo -> result is already NCHW
    out = out_flat[:, :, :S].reshape(N, Ctot, Hp, Wp)
    return out[:, :, 2:2 + H, 2:2 + W]


# --------------------------------------------------------------------------
# Deterministic parameter init (PyTorch-style Conv2d uniform init, OIHW)
# --------------------------------------------------------------------------
def make_params(key, in_channels, n1x1, n3x3red, n3x3, n5x5red, n5x5, pool_planes):
    keys = jax.random.split(key, 6)

    def conv_init(k, cout, cin, ksz):
        kw, kb = jax.random.split(k)
        bound = 1.0 / float(np.sqrt(cin * ksz * ksz))
        w = jax.random.uniform(kw, (cout, cin, ksz, ksz), jnp.float32, -bound, bound)
        b = jax.random.uniform(kb, (cout,), jnp.float32, -bound, bound)
        return w, b

    w1, b1 = conv_init(keys[0], n1x1, in_channels, 1)
    w2r, b2r = conv_init(keys[1], n3x3red, in_channels, 1)
    w3, b3 = conv_init(keys[2], n3x3, in_channels, 3)   # module uses in_channels here
    w5r, b5r = conv_init(keys[3], n5x5red, in_channels, 1)
    w5, b5 = conv_init(keys[4], n5x5, in_channels, 5)   # module uses in_channels here
    wp, bp = conv_init(keys[5], pool_planes, in_channels, 1)
    return dict(w1=w1, b1=b1, w2r=w2r, b2r=b2r, w3=w3, b3=b3,
                w5r=w5r, b5r=b5r, w5=w5, b5=b5, wp=wp, bp=bp)


# --------------------------------------------------------------------------
# Pure-JAX reference (matches PyTorch semantics) for a correctness check
# --------------------------------------------------------------------------
def inception_reference(x, p):
    def conv(a, w, b, pad):
        y = lax.conv_general_dilated(a, w, (1, 1), [(pad, pad), (pad, pad)],
                                     dimension_numbers=('NCHW', 'OIHW', 'NCHW'))
        return y + b[None, :, None, None]

    r = jax.nn.relu
    x1 = r(conv(x, p['w1'], p['b1'], 0))
    x2 = r(conv(r(conv(x, p['w2r'], p['b2r'], 0)), p['w3'], p['b3'], 1))
    x3 = r(conv(r(conv(x, p['w5r'], p['b5r'], 0)), p['w5'], p['b5'], 2))
    pooled = lax.reduce_window(x, -jnp.inf, lax.max, (1, 1, 3, 3), (1, 1, 1, 1),
                               [(0, 0), (0, 0), (1, 1), (1, 1)])
    x4 = r(conv(pooled, p['wp'], p['bp'], 0))
    return jnp.concatenate([x1, x2, x3, x4], axis=1)


if __name__ == "__main__":
    N, in_channels, H, W = 2, 4, 16, 16
    # n3x3red / n5x5red must equal in_channels for the PyTorch module to run.
    n1x1, n3x3red, n3x3, n5x5red, n5x5, pool_planes = 8, 4, 8, 4, 8, 8

    key = jax.random.PRNGKey(0)
    kp, kx = jax.random.split(key)
    params = make_params(kp, in_channels, n1x1, n3x3red, n3x3,
                         n5x5red, n5x5, pool_planes)
    x = jax.random.normal(kx, (N, in_channels, H, W), jnp.float32)

    out = jax.block_until_ready(inception_block_pallas(x, params))
    ref = jax.block_until_ready(inception_reference(x, params))

    assert out.shape == (N, n1x1 + n3x3 + n5x5 + pool_planes, H, W), out.shape
    np.testing.assert_allclose(np.asarray(out), np.asarray(ref),
                               rtol=1e-3, atol=1e-3)
    print("KERNEL_OK")
</pallas_src>

<mosaic_0001>
module attributes {stable_mosaic.version = 11 : i64} {
  func.func @kernel(%arg0: i32, %arg1: memref<1x4x512xf32, #tpu.memory_space<vmem>>, %arg2: memref<1x512xf32, #tpu.memory_space<vmem>>, %arg3: memref<1x512xf32, #tpu.memory_space<vmem>>, %arg4: memref<16x4xf32, #tpu.memory_space<vmem>>, %arg5: memref<16x1xf32, #tpu.memory_space<vmem>>, %arg6: memref<72x4xf32, #tpu.memory_space<vmem>>, %arg7: memref<8x1xf32, #tpu.memory_space<vmem>>, %arg8: memref<200x4xf32, #tpu.memory_space<vmem>>, %arg9: memref<8x1xf32, #tpu.memory_space<vmem>>, %arg10: memref<8x4xf32, #tpu.memory_space<vmem>>, %arg11: memref<8x1xf32, #tpu.memory_space<vmem>>, %arg12: memref<1x32x512xf32, #tpu.memory_space<vmem>>) attributes {dimension_semantics = [#tpu.dimension_semantics<parallel>], iteration_bounds = array<i64: 2>, scalar_prefetch = 0 : i64, scratch_operands = 0 : i64, tpu.core_type = #tpu.core_type<tc>, window_params = [{transform_indices = @transform_0, window_bounds = array<i64: 1, 4, 512>}, {pipeline_mode = #tpu.pipeline_mode<synchronous>, transform_indices = @transform_1, window_bounds = array<i64: 1, 512>}, {pipeline_mode = #tpu.pipeline_mode<synchronous>, transform_indices = @transform_2, window_bounds = array<i64: 1, 512>}, {pipeline_mode = #tpu.pipeline_mode<synchronous>, transform_indices = @transform_3, window_bounds = array<i64: 16, 4>}, {pipeline_mode = #tpu.pipeline_mode<synchronous>, transform_indices = @transform_4, window_bounds = array<i64: 16, 1>}, {pipeline_mode = #tpu.pipeline_mode<synchronous>, transform_indices = @transform_5, window_bounds = array<i64: 72, 4>}, {pipeline_mode = #tpu.pipeline_mode<synchronous>, transform_indices = @transform_6, window_bounds = array<i64: 8, 1>}, {pipeline_mode = #tpu.pipeline_mode<synchronous>, transform_indices = @transform_7, window_bounds = array<i64: 200, 4>}, {pipeline_mode = #tpu.pipeline_mode<synchronous>, transform_indices = @transform_8, window_bounds = array<i64: 8, 1>}, {pipeline_mode = #tpu.pipeline_mode<synchronous>, transform_indices = @transform_9, window_bounds = array<i64: 8, 4>}, {pipeline_mode = #tpu.pipeline_mode<synchronous>, transform_indices = @transform_10, window_bounds = array<i64: 8, 1>}, {transform_indices = @transform_11, window_bounds = array<i64: 1, 32, 512>}]} {
    %c0 = arith.constant 0 : index
    %c0_0 = arith.constant 0 : index
    %c0_1 = arith.constant 0 : index
    %0 = vector.load %arg1[%c0, %c0_0, %c0_1] : memref<1x4x512xf32, #tpu.memory_space<vmem>>, vector<1x4x512xf32>
    %1 = vector.shape_cast %0 : vector<1x4x512xf32> to vector<4x512xf32>
    %c0_2 = arith.constant 0 : index
    %c0_3 = arith.constant 0 : index
    %2 = vector.load %arg2[%c0_2, %c0_3] : memref<1x512xf32, #tpu.memory_space<vmem>>, vector<1x512xf32>
    %c0_4 = arith.constant 0 : index
    %c0_5 = arith.constant 0 : index
    %3 = vector.load %arg4[%c0_4, %c0_5] : memref<16x4xf32, #tpu.memory_space<vmem>>, vector<16x4xf32>
    %cst = arith.constant dense<0.000000e+00> : vector<16x512xf32>
    %4 = tpu.matmul %3, %1, %cst {dimension_numbers = #tpu.dot_dimension_numbers<[1], [0], [0], [1], [0, 0, 1, 1], [], []>} : vector<16x4xf32>, vector<4x512xf32>, vector<16x512xf32> -> vector<16x512xf32>
    %c0_6 = arith.constant 0 : index
    %c0_7 = arith.constant 0 : index
    %5 = vector.load %arg5[%c0_6, %c0_7] : memref<16x1xf32, #tpu.memory_space<vmem>>, vector<16x1xf32>
    %6 = vector.broadcast %5 : vector<16x1xf32> to vector<16x512xf32>
    %7 = arith.addf %4, %6 : vector<16x512xf32>
    %cst_8 = arith.constant 0.000000e+00 : f32
    %8 = vector.broadcast %cst_8 : f32 to vector<16x512xf32>
    %9 = arith.maximumf %7, %8 : vector<16x512xf32>
    %10 = vector.broadcast %2 : vector<1x512xf32> to vector<16x512xf32>
    %11 = arith.mulf %9, %10 : vector<16x512xf32>
    %12 = vector.extract_strided_slice %11 {offsets = [0, 0], sizes = [8, 512], strides = [1, 1]} : vector<16x512xf32> to vector<8x512xf32>
    %13 = vector.extract_strided_slice %11 {offsets = [8, 0], sizes = [4, 512], strides = [1, 1]} : vector<16x512xf32> to vector<4x512xf32>
    %14 = vector.extract_strided_slice %11 {offsets = [12, 0], sizes = [4, 512], strides = [1, 1]} : vector<16x512xf32> to vector<4x512xf32>
    %c0_9 = arith.constant 0 : index
    %c0_10 = arith.constant 0 : index
    %15 = vector.load %arg6[%c0_9, %c0_10] : memref<72x4xf32, #tpu.memory_space<vmem>>, vector<72x4xf32>
    %cst_11 = arith.constant dense<0.000000e+00> : vector<72x512xf32>
    %16 = tpu.matmul %15, %13, %cst_11 {dimension_numbers = #tpu.dot_dimension_numbers<[1], [0], [0], [1], [0, 0, 1, 1], [], []>} : vector<72x4xf32>, vector<4x512xf32>, vector<72x512xf32> -> vector<72x512xf32>
    %c0_12 = arith.constant 0 : index
    %c0_13 = arith.constant 0 : index
    %17 = vector.load %arg7[%c0_12, %c0_13] : memref<8x1xf32, #tpu.memory_space<vmem>>, vector<8x1xf32>
    %18 = vector.extract_strided_slice %16 {offsets = [0, 0], sizes = [8, 512], strides = [1, 1]} : vector<72x512xf32> to vector<8x512xf32>
    %c21_i32 = arith.constant 21 : i32
    %19 = tpu.dynamic_rotate %18 by %c21_i32 dim 1 : vector<8x512xf32>, i32 -> vector<8x512xf32>
    %20 = vector.broadcast %17 : vector<8x1xf32> to vector<8x512xf32>
    %21 = arith.addf %20, %19 : vector<8x512xf32>
    %22 = vector.extract_strided_slice %16 {offsets = [8, 0], sizes = [8, 512], strides = [1, 1]} : vector<72x512xf32> to vector<8x512xf32>
    %c20_i32 = arith.constant 20 : i32
    %23 = tpu.dynamic_rotate %22 by %c20_i32 dim 1 : vector<8x512xf32>, i32 -> vector<8x512xf32>
    %24 = arith.addf %21, %23 : vector<8x512xf32>
    %25 = vector.extract_strided_slice %16 {offsets = [16, 0], sizes = [8, 512], strides = [1, 1]} : vector<72x512xf32> to vector<8x512xf32>
    %c19_i32 = arith.constant 19 : i32
    %26 = tpu.dynamic_rotate %25 by %c19_i32 dim 1 : vector<8x512xf32>, i32 -> vector<8x512xf32>
    %27 = arith.addf %24, %26 : vector<8x512xf32>
    %28 = vector.extract_strided_slice %16 {offsets = [24, 0], sizes = [8, 512], strides = [1, 1]} : vector<72x512xf32> to vector<8x512xf32>
    %c1_i32 = arith.constant 1 : i32
    %29 = tpu.dynamic_rotate %28 by %c1_i32 dim 1 : vector<8x512xf32>, i32 -> vector<8x512xf32>
    %30 = arith.addf %27, %29 : vector<8x512xf32>
    %31 = vector.extract_strided_slice %16 {offsets = [32, 0], sizes = [8, 512], strides = [1, 1]} : vector<72x512xf32> to vector<8x512xf32>
    %32 = arith.addf %30, %31 : vector<8x512xf32>
    %33 = vector.extract_strided_slice %16 {offsets = [40, 0], sizes = [8, 512], strides = [1, 1]} : vector<72x512xf32> to vector<8x512xf32>
    %c511_i32 = arith.constant 511 : i32
    %34 = tpu.dynamic_rotate %33 by %c511_i32 dim 1 : vector<8x512xf32>, i32 -> vector<8x512xf32>
    %35 = arith.addf %32, %34 : vector<8x512xf32>
    %36 = vector.extract_strided_slice %16 {offsets = [48, 0], sizes = [8, 512], strides = [1, 1]} : vector<72x512xf32> to vector<8x512xf32>
    %c493_i32 = arith.constant 493 : i32
    %37 = tpu.dynamic_rotate %36 by %c493_i32 dim 1 : vector<8x512xf32>, i32 -> vector<8x512xf32>
    %38 = arith.addf %35, %37 : vector<8x512xf32>
    %39 = vector.extract_strided_slice %16 {offsets = [56, 0], sizes = [8, 512], strides = [1, 1]} : vector<72x512xf32> to vector<8x512xf32>
    %c492_i32 = arith.constant 492 : i32
    %40 = tpu.dynamic_rotate %39 by %c492_i32 dim 1 : vector<8x512xf32>, i32 -> vector<8x512xf32>
    %41 = arith.addf %38, %40 : vector<8x512xf32>
    %42 = vector.extract_strided_slice %16 {offsets = [64, 0], sizes = [8, 512], strides = [1, 1]} : vector<72x512xf32> to vector<8x512xf32>
    %c491_i32 = arith.constant 491 : i32
    %43 = tpu.dynamic_rotate %42 by %c491_i32 dim 1 : vector<8x512xf32>, i32 -> vector<8x512xf32>
    %44 = arith.addf %41, %43 : vector<8x512xf32>
    %cst_14 = arith.constant 0.000000e+00 : f32
    %45 = vector.broadcast %cst_14 : f32 to vector<8x512xf32>
    %46 = arith.maximumf %44, %45 : vector<8x512xf32>
    %c0_15 = arith.constant 0 : index
    %c0_16 = arith.constant 0 : index
    %47 = vector.load %arg8[%c0_15, %c0_16] : memref<200x4xf32, #tpu.memory_space<vmem>>, vector<200x4xf32>
    %cst_17 = arith.constant dense<0.000000e+00> : vector<200x512xf32>
    %48 = tpu.matmul %47, %14, %cst_17 {dimension_numbers = #tpu.dot_dimension_numbers<[1], [0], [0], [1], [0, 0, 1, 1], [], []>} : vector<200x4xf32>, vector<4x512xf32>, vector<200x512xf32> -> vector<200x512xf32>
    %c0_18 = arith.constant 0 : index
    %c0_19 = arith.constant 0 : index
    %49 = vector.load %arg9[%c0_18, %c0_19] : memref<8x1xf32, #tpu.memory_space<vmem>>, vector<8x1xf32>
    %50 = vector.extract_strided_slice %48 {offsets = [0, 0], sizes = [8, 512], strides = [1, 1]} : vector<200x512xf32> to vector<8x512xf32>
    %c42_i32 = arith.constant 42 : i32
    %51 = tpu.dynamic_rotate %50 by %c42_i32 dim 1 : vector<8x512xf32>, i32 -> vector<8x512xf32>
    %52 = vector.broadcast %49 : vector<8x1xf32> to vector<8x512xf32>
    %53 = arith.addf %52, %51 : vector<8x512xf32>
    %54 = vector.extract_strided_slice %48 {offsets = [8, 0], sizes = [8, 512], strides = [1, 1]} : vector<200x512xf32> to vector<8x512xf32>
    %c41_i32 = arith.constant 41 : i32
    %55 = tpu.dynamic_rotate %54 by %c41_i32 dim 1 : vector<8x512xf32>, i32 -> vector<8x512xf32>
    %56 = arith.addf %53, %55 : vector<8x512xf32>
    %57 = vector.extract_strided_slice %48 {offsets = [16, 0], sizes = [8, 512], strides = [1, 1]} : vector<200x512xf32> to vector<8x512xf32>
    %c40_i32 = arith.constant 40 : i32
    %58 = tpu.dynamic_rotate %57 by %c40_i32 dim 1 : vector<8x512xf32>, i32 -> vector<8x512xf32>
    %59 = arith.addf %56, %58 : vector<8x512xf32>
    %60 = vector.extract_strided_slice %48 {offsets = [24, 0], sizes = [8, 512], strides = [1, 1]} : vector<200x512xf32> to vector<8x512xf32>
    %c39_i32 = arith.constant 39 : i32
    %61 = tpu.dynamic_rotate %60 by %c39_i32 dim 1 : vector<8x512xf32>, i32 -> vector<8x512xf32>
    %62 = arith.addf %59, %61 : vector<8x512xf32>
    %63 = vector.extract_strided_slice %48 {offsets = [32, 0], sizes = [8, 512], strides = [1, 1]} : vector<200x512xf32> to vector<8x512xf32>
    %c38_i32 = arith.constant 38 : i32
    %64 = tpu.dynamic_rotate %63 by %c38_i32 dim 1 : vector<8x512xf32>, i32 -> vector<8x512xf32>
    %65 = arith.addf %62, %64 : vector<8x512xf32>
    %66 = vector.extract_strided_slice %48 {offsets = [40, 0], sizes = [8, 512], strides = [1, 1]} : vector<200x512xf32> to vector<8x512xf32>
    %c22_i32 = arith.constant 22 : i32
    %67 = tpu.dynamic_rotate %66 by %c22_i32 dim 1 : vector<8x512xf32>, i32 -> vector<8x512xf32>
    %68 = arith.addf %65, %67 : vector<8x512xf32>
    %69 = vector.extract_strided_slice %48 {offsets = [48, 0], sizes = [8, 512], strides = [1, 1]} : vector<200x512xf32> to vector<8x512xf32>
    %c21_i32_20 = arith.constant 21 : i32
    %70 = tpu.dynamic_rotate %69 by %c21_i32_20 dim 1 : vector<8x512xf32>, i32 -> vector<8x512xf32>
    %71 = arith.addf %68, %70 : vector<8x512xf32>
    %72 = vector.extract_strided_slice %48 {offsets = [56, 0], sizes = [8, 512], strides = [1, 1]} : vector<200x512xf32> to vector<8x512xf32>
    %c20_i32_21 = arith.constant 20 : i32
    %73 = tpu.dynamic_rotate %72 by %c20_i32_21 dim 1 : vector<8x512xf32>, i32 -> vector<8x512xf32>
    %74 = arith.addf %71, %73 : vector<8x512xf32>
    %75 = vector.extract_strided_slice %48 {offsets = [64, 0], sizes = [8, 512], strides = [1, 1]} : vector<200x512xf32> to vector<8x512xf32>
    %c19_i32_22 = arith.constant 19 : i32
    %76 = tpu.dynamic_rotate %75 by %c19_i32_22 dim 1 : vector<8x512xf32>, i32 -> vector<8x512xf32>
    %77 = arith.addf %74, %76 : vector<8x512xf32>
    %78 = vector.extract_strided_slice %48 {offsets = [72, 0], sizes = [8, 512], strides = [1, 1]} : vector<200x512xf32> to vector<8x512xf32>
    %c18_i32 = arith.constant 18 : i32
    %79 = tpu.dynamic_rotate %78 by %c18_i32 dim 1 : vector<8x512xf32>, i32 -> vector<8x512xf32>
    %80 = arith.addf %77, %79 : vector<8x512xf32>
    %81 = vector.extract_strided_slice %48 {offsets = [80, 0], sizes = [8, 512], strides = [1, 1]} : vector<200x512xf32> to vector<8x512xf32>
    %c2_i32 = arith.constant 2 : i32
    %82 = tpu.dynamic_rotate %81 by %c2_i32 dim 1 : vector<8x512xf32>, i32 -> vector<8x512xf32>
    %83 = arith.addf %80, %82 : vector<8x512xf32>
    %84 = vector.extract_strided_slice %48 {offsets = [88, 0], sizes = [8, 512], strides = [1, 1]} : vector<200x512xf32> to vector<8x512xf32>
    %c1_i32_23 = arith.constant 1 : i32
    %85 = tpu.dynamic_rotate %84 by %c1_i32_23 dim 1 : vector<8x512xf32>, i32 -> vector<8x512xf32>
    %86 = arith.addf %83, %85 : vector<8x512xf32>
    %87 = vector.extract_strided_slice %48 {offsets = [96, 0], sizes = [8, 512], strides = [1, 1]} : vector<200x512xf32> to vector<8x512xf32>
    %88 = arith.addf %86, %87 : vector<8x512xf32>
    %89 = vector.extract_strided_slice %48 {offsets = [104, 0], sizes = [8, 512], strides = [1, 1]} : vector<200x512xf32> to vector<8x512xf32>
    %c511_i32_24 = arith.constant 511 : i32
    %90 = tpu.dynamic_rotate %89 by %c511_i32_24 dim 1 : vector<8x512xf32>, i32 -> vector<8x512xf32>
    %91 = arith.addf %88, %90 : vector<8x512xf32>
    %92 = vector.extract_strided_slice %48 {offsets = [112, 0], sizes = [8, 512], strides = [1, 1]} : vector<200x512xf32> to vector<8x512xf32>
    %c510_i32 = arith.constant 510 : i32
    %93 = tpu.dynamic_rotate %92 by %c510_i32 dim 1 : vector<8x512xf32>, i32 -> vector<8x512xf32>
    %94 = arith.addf %91, %93 : vector<8x512xf32>
    %95 = vector.extract_strided_slice %48 {offsets = [120, 0], sizes = [8, 512], strides = [1, 1]} : vector<200x512xf32> to vector<8x512xf32>
    %c494_i32 = arith.constant 494 : i32
    %96 = tpu.dynamic_rotate %95 by %c494_i32 dim 1 : vector<8x512xf32>, i32 -> vector<8x512xf32>
    %97 = arith.addf %94, %96 : vector<8x512xf32>
    %98 = vector.extract_strided_slice %48 {offsets = [128, 0], sizes = [8, 512], strides = [1, 1]} : vector<200x512xf32> to vector<8x512xf32>
    %c493_i32_25 = arith.constant 493 : i32
    %99 = tpu.dynamic_rotate %98 by %c493_i32_25 dim 1 : vector<8x512xf32>, i32 -> vector<8x512xf32>
    %100 = arith.addf %97, %99 : vector<8x512xf32>
    %101 = vector.extract_strided_slice %48 {offsets = [136, 0], sizes = [8, 512], strides = [1, 1]} : vector<200x512xf32> to vector<8x512xf32>
    %c492_i32_26 = arith.constant 492 : i32
    %102 = tpu.dynamic_rotate %101 by %c492_i32_26 dim 1 : vector<8x512xf32>, i32 -> vector<8x512xf32>
    %103 = arith.addf %100, %102 : vector<8x512xf32>
    %104 = vector.extract_strided_slice %48 {offsets = [144, 0], sizes = [8, 512], strides = [1, 1]} : vector<200x512xf32> to vector<8x512xf32>
    %c491_i32_27 = arith.constant 491 : i32
    %105 = tpu.dynamic_rotate %104 by %c491_i32_27 dim 1 : vector<8x512xf32>, i32 -> vector<8x512xf32>
    %106 = arith.addf %103, %105 : vector<8x512xf32>
    %107 = vector.extract_strided_slice %48 {offsets = [152, 0], sizes = [8, 512], strides = [1, 1]} : vector<200x512xf32> to vector<8x512xf32>
    %c490_i32 = arith.constant 490 : i32
    %108 = tpu.dynamic_rotate %107 by %c490_i32 dim 1 : vector<8x512xf32>, i32 -> vector<8x512xf32>
    %109 = arith.addf %106, %108 : vector<8x512xf32>
    %110 = vector.extract_strided_slice %48 {offsets = [160, 0], sizes = [8, 512], strides = [1, 1]} : vector<200x512xf32> to vector<8x512xf32>
    %c474_i32 = arith.constant 474 : i32
    %111 = tpu.dynamic_rotate %110 by %c474_i32 dim 1 : vector<8x512xf32>, i32 -> vector<8x512xf32>
    %112 = arith.addf %109, %111 : vector<8x512xf32>
    %113 = vector.extract_strided_slice %48 {offsets = [168, 0], sizes = [8, 512], strides = [1, 1]} : vector<200x512xf32> to vector<8x512xf32>
    %c473_i32 = arith.constant 473 : i32
    %114 = tpu.dynamic_rotate %113 by %c473_i32 dim 1 : vector<8x512xf32>, i32 -> vector<8x512xf32>
    %115 = arith.addf %112, %114 : vector<8x512xf32>
    %116 = vector.extract_strided_slice %48 {offsets = [176, 0], sizes = [8, 512], strides = [1, 1]} : vector<200x512xf32> to vector<8x512xf32>
    %c472_i32 = arith.constant 472 : i32
    %117 = tpu.dynamic_rotate %116 by %c472_i32 dim 1 : vector<8x512xf32>, i32 -> vector<8x512xf32>
    %118 = arith.addf %115, %117 : vector<8x512xf32>
    %119 = vector.extract_strided_slice %48 {offsets = [184, 0], sizes = [8, 512], strides = [1, 1]} : vector<200x512xf32> to vector<8x512xf32>
    %c471_i32 = arith.constant 471 : i32
    %120 = tpu.dynamic_rotate %119 by %c471_i32 dim 1 : vector<8x512xf32>, i32 -> vector<8x512xf32>
    %121 = arith.addf %118, %120 : vector<8x512xf32>
    %122 = vector.extract_strided_slice %48 {offsets = [192, 0], sizes = [8, 512], strides = [1, 1]} : vector<200x512xf32> to vector<8x512xf32>
    %c470_i32 = arith.constant 470 : i32
    %123 = tpu.dynamic_rotate %122 by %c470_i32 dim 1 : vector<8x512xf32>, i32 -> vector<8x512xf32>
    %124 = arith.addf %121, %123 : vector<8x512xf32>
    %cst_28 = arith.constant 0.000000e+00 : f32
    %125 = vector.broadcast %cst_28 : f32 to vector<8x512xf32>
    %126 = arith.maximumf %124, %125 : vector<8x512xf32>
    %c0_29 = arith.constant 0 : index
    %c0_30 = arith.constant 0 : index
    %127 = vector.load %arg3[%c0_29, %c0_30] : memref<1x512xf32, #tpu.memory_space<vmem>>, vector<1x512xf32>
    %128 = vector.broadcast %127 : vector<1x512xf32> to vector<4x512xf32>
    %129 = arith.addf %1, %128 : vector<4x512xf32>
    %c21_i32_31 = arith.constant 21 : i32
    %130 = tpu.dynamic_rotate %129 by %c21_i32_31 dim 1 : vector<4x512xf32>, i32 -> vector<4x512xf32>
    %131 = arith.maximumf %129, %130 : vector<4x512xf32>
    %c20_i32_32 = arith.constant 20 : i32
    %132 = tpu.dynamic_rotate %129 by %c20_i32_32 dim 1 : vector<4x512xf32>, i32 -> vector<4x512xf32>
    %133 = arith.maximumf %131, %132 : vector<4x512xf32>
    %c19_i32_33 = arith.constant 19 : i32
    %134 = tpu.dynamic_rotate %129 by %c19_i32_33 dim 1 : vector<4x512xf32>, i32 -> vector<4x512xf32>
    %135 = arith.maximumf %133, %134 : vector<4x512xf32>
    %c1_i32_34 = arith.constant 1 : i32
    %136 = tpu.dynamic_rotate %129 by %c1_i32_34 dim 1 : vector<4x512xf32>, i32 -> vector<4x512xf32>
    %137 = arith.maximumf %135, %136 : vector<4x512xf32>
    %c511_i32_35 = arith.constant 511 : i32
    %138 = tpu.dynamic_rotate %129 by %c511_i32_35 dim 1 : vector<4x512xf32>, i32 -> vector<4x512xf32>
    %139 = arith.maximumf %137, %138 : vector<4x512xf32>
    %c493_i32_36 = arith.constant 493 : i32
    %140 = tpu.dynamic_rotate %129 by %c493_i32_36 dim 1 : vector<4x512xf32>, i32 -> vector<4x512xf32>
    %141 = arith.maximumf %139, %140 : vector<4x512xf32>
    %c492_i32_37 = arith.constant 492 : i32
    %142 = tpu.dynamic_rotate %129 by %c492_i32_37 dim 1 : vector<4x512xf32>, i32 -> vector<4x512xf32>
    %143 = arith.maximumf %141, %142 : vector<4x512xf32>
    %c491_i32_38 = arith.constant 491 : i32
    %144 = tpu.dynamic_rotate %129 by %c491_i32_38 dim 1 : vector<4x512xf32>, i32 -> vector<4x512xf32>
    %145 = arith.maximumf %143, %144 : vector<4x512xf32>
    %c0_39 = arith.constant 0 : index
    %c0_40 = arith.constant 0 : index
    %146 = vector.load %arg10[%c0_39, %c0_40] : memref<8x4xf32, #tpu.memory_space<vmem>>, vector<8x4xf32>
    %cst_41 = arith.constant dense<0.000000e+00> : vector<8x512xf32>
    %147 = tpu.matmul %146, %145, %cst_41 {dimension_numbers = #tpu.dot_dimension_numbers<[1], [0], [0], [1], [0, 0, 1, 1], [], []>} : vector<8x4xf32>, vector<4x512xf32>, vector<8x512xf32> -> vector<8x512xf32>
    %c0_42 = arith.constant 0 : index
    %c0_43 = arith.constant 0 : index
    %148 = vector.load %arg11[%c0_42, %c0_43] : memref<8x1xf32, #tpu.memory_space<vmem>>, vector<8x1xf32>
    %149 = vector.broadcast %148 : vector<8x1xf32> to vector<8x512xf32>
    %150 = arith.addf %147, %149 : vector<8x512xf32>
    %cst_44 = arith.constant 0.000000e+00 : f32
    %151 = vector.broadcast %cst_44 : f32 to vector<8x512xf32>
    %152 = arith.maximumf %150, %151 : vector<8x512xf32>
    %c0_45 = arith.constant 0 : index
    %c0_46 = arith.constant 0 : index
    %c0_47 = arith.constant 0 : index
    %153 = vector.load %arg12[%c0_45, %c0_46, %c0_47] : memref<1x32x512xf32, #tpu.memory_space<vmem>>, vector<1x8x512xf32>
    %154 = vector.shape_cast %153 : vector<1x8x512xf32> to vector<8x512xf32>
    %155 = vector.shape_cast %12 : vector<8x512xf32> to vector<1x8x512xf32>
    tpu.vector_store %arg12[%c0_45, %c0_46, %c0_47], %155 {strides = array<i32>} : memref<1x32x512xf32, #tpu.memory_space<vmem>>, vector<1x8x512xf32>,
    %c0_48 = arith.constant 0 : index
    %c8 = arith.constant 8 : index
    %c0_49 = arith.constant 0 : index
    %156 = vector.load %arg12[%c0_48, %c8, %c0_49] : memref<1x32x512xf32, #tpu.memory_space<vmem>>, vector<1x8x512xf32>
    %157 = vector.shape_cast %156 : vector<1x8x512xf32> to vector<8x512xf32>
    %158 = vector.shape_cast %46 : vector<8x512xf32> to vector<1x8x512xf32>
    tpu.vector_store %arg12[%c0_48, %c8, %c0_49], %158 {strides = array<i32>} : memref<1x32x512xf32, #tpu.memory_space<vmem>>, vector<1x8x512xf32>,
    %c0_50 = arith.constant 0 : index
    %c16 = arith.constant 16 : index
    %c0_51 = arith.constant 0 : index
    %159 = vector.load %arg12[%c0_50, %c16, %c0_51] : memref<1x32x512xf32, #tpu.memory_space<vmem>>, vector<1x8x512xf32>
    %160 = vector.shape_cast %159 : vector<1x8x512xf32> to vector<8x512xf32>
    %161 = vector.shape_cast %126 : vector<8x512xf32> to vector<1x8x512xf32>
    tpu.vector_store %arg12[%c0_50, %c16, %c0_51], %161 {strides = array<i32>} : memref<1x32x512xf32, #tpu.memory_space<vmem>>, vector<1x8x512xf32>,
    %c0_52 = arith.constant 0 : index
    %c24 = arith.constant 24 : index
    %c0_53 = arith.constant 0 : index
    %162 = vector.load %arg12[%c0_52, %c24, %c0_53] : memref<1x32x512xf32, #tpu.memory_space<vmem>>, vector<1x8x512xf32>
    %163 = vector.shape_cast %162 : vector<1x8x512xf32> to vector<8x512xf32>
    %164 = vector.shape_cast %152 : vector<8x512xf32> to vector<1x8x512xf32>
    tpu.vector_store %arg12[%c0_52, %c24, %c0_53], %164 {strides = array<i32>} : memref<1x32x512xf32, #tpu.memory_space<vmem>>, vector<1x8x512xf32>,
    return
  }
  func.func @transform_0(%arg0: i32) -> (i32, i32, i32) {
    %c0_i32 = arith.constant 0 : i32
    %c0_i32_0 = arith.constant 0 : i32
    %c0_i32_1 = arith.constant 0 : i32
    return %arg0, %c0_i32, %c0_i32_0 : i32, i32, i32
  }
  func.func @transform_1(%arg0: i32) -> (i32, i32) {
    %c0_i32 = arith.constant 0 : i32
    %c0_i32_0 = arith.constant 0 : i32
    %c0_i32_1 = arith.constant 0 : i32
    return %c0_i32, %c0_i32_0 : i32, i32
  }
  func.func @transform_2(%arg0: i32) -> (i32, i32) {
    %c0_i32 = arith.constant 0 : i32
    %c0_i32_0 = arith.constant 0 : i32
    %c0_i32_1 = arith.constant 0 : i32
    return %c0_i32, %c0_i32_0 : i32, i32
  }
  func.func @transform_3(%arg0: i32) -> (i32, i32) {
    %c0_i32 = arith.constant 0 : i32
    %c0_i32_0 = arith.constant 0 : i32
    %c0_i32_1 = arith.constant 0 : i32
    return %c0_i32, %c0_i32_0 : i32, i32
  }
  func.func @transform_4(%arg0: i32) -> (i32, i32) {
    %c0_i32 = arith.constant 0 : i32
    %c0_i32_0 = arith.constant 0 : i32
    %c0_i32_1 = arith.constant 0 : i32
    return %c0_i32, %c0_i32_0 : i32, i32
  }
  func.func @transform_5(%arg0: i32) -> (i32, i32) {
    %c0_i32 = arith.constant 0 : i32
    %c0_i32_0 = arith.constant 0 : i32
    %c0_i32_1 = arith.constant 0 : i32
    return %c0_i32, %c0_i32_0 : i32, i32
  }
  func.func @transform_6(%arg0: i32) -> (i32, i32) {
    %c0_i32 = arith.constant 0 : i32
    %c0_i32_0 = arith.constant 0 : i32
    %c0_i32_1 = arith.constant 0 : i32
    return %c0_i32, %c0_i32_0 : i32, i32
  }
  func.func @transform_7(%arg0: i32) -> (i32, i32) {
    %c0_i32 = arith.constant 0 : i32
    %c0_i32_0 = arith.constant 0 : i32
    %c0_i32_1 = arith.constant 0 : i32
    return %c0_i32, %c0_i32_0 : i32, i32
  }
  func.func @transform_8(%arg0: i32) -> (i32, i32) {
    %c0_i32 = arith.constant 0 : i32
    %c0_i32_0 = arith.constant 0 : i32
    %c0_i32_1 = arith.constant 0 : i32
    return %c0_i32, %c0_i32_0 : i32, i32
  }
  func.func @transform_9(%arg0: i32) -> (i32, i32) {
    %c0_i32 = arith.constant 0 : i32
    %c0_i32_0 = arith.constant 0 : i32
    %c0_i32_1 = arith.constant 0 : i32
    return %c0_i32, %c0_i32_0 : i32, i32
  }
  func.func @transform_10(%arg0: i32) -> (i32, i32) {
    %c0_i32 = arith.constant 0 : i32
    %c0_i32_0 = arith.constant 0 : i32
    %c0_i32_1 = arith.constant 0 : i32
    return %c0_i32, %c0_i32_0 : i32, i32
  }
  func.func @transform_11(%arg0: i32) -> (i32, i32, i32) {
    %c0_i32 = arith.constant 0 : i32
    %c0_i32_0 = arith.constant 0 : i32
    %c0_i32_1 = arith.constant 0 : i32
    return %arg0, %c0_i32, %c0_i32_0 : i32, i32, i32
  }
}

</mosaic_0001>

<llo_original>
// kernel: tpu_custom_call.1
$region0: #{tpu_custom_call.1}
  #allocation0 [shape = 'u32[]', space=smem, size = 0x4, offset = 0x4, fixed_abs, tag = 'smem constant byte address 0x4 - core index']
  #allocation1 [shape = 'u32[144,128]{1,0:T(1,128)}', space=vmem, size = 0x12000, scoped, tag = 'internal scratch']
  %s0 = inlined_call_operand.vmem [shape: f32[2,4,512], index: 0, kind: input, shape index: {}]
  %s1 = inlined_call_operand.vmem [shape: f32[1,512], index: 1, kind: input, shape index: {}]
  %s2 = inlined_call_operand.vmem [shape: f32[1,512], index: 2, kind: input, shape index: {}]
  %s3 = inlined_call_operand.vmem [shape: f32[16,4], index: 3, kind: input, shape index: {}]
  %s4 = inlined_call_operand.vmem [shape: f32[16,1], index: 4, kind: input, shape index: {}]
  %s5 = inlined_call_operand.vmem [shape: f32[72,4], index: 5, kind: input, shape index: {}]
  %s6 = inlined_call_operand.vmem [shape: f32[8,1], index: 6, kind: input, shape index: {}]
  %s7 = inlined_call_operand.vmem [shape: f32[200,4], index: 7, kind: input, shape index: {}]
  %s8 = inlined_call_operand.vmem [shape: f32[8,1], index: 8, kind: input, shape index: {}]
  %s9 = inlined_call_operand.vmem [shape: f32[8,4], index: 9, kind: input, shape index: {}]
  %s10 = inlined_call_operand.vmem [shape: f32[8,1], index: 10, kind: input, shape index: {}]
  %s11 = inlined_call_operand.hbm [shape: f32[2,32,512], index: 11, kind: output, shape index: {}]
  %s12 = sld [smem:[#allocation0]]
  $region77: #{tpu_custom_call.1} parent=0
    _
  %s14 = ssub.s32 1, %s12
  %s15 = scalar_select 0, %s14, %s12
  $region1: #{tpu_custom_call.1} parent=0
    #allocation2 [shape = 'u8[131072]{0}', space=vmem, size = 0x20000, scoped, tag = 'output window, operand 0']
    #allocation3 [shape = 's32[2]{0}', space=sflag, size = 0x8, scoped, tag = 'scoped memory for tpu_custom_call.1']
    %16 = vsyncpa [#allocation3], 0
    %s17 = scalar_lea.sflag [#allocation3], 1
    %18 = vsyncpa %s17, 0
    loop: start=0, step=1, limit=4
    $region2: #{tpu_custom_call.1} parent=1 // loop_pre_header
      _
    $region3: #{tpu_custom_call.1} parent=1 // loop_header
      %s20 = sphi 0, %s24
      %p21 = scmp.ge.s32.totalorder %s20, 4
      %s30 = sphi 0, %s32
      %s33 = sphi 0, %s30
      %s34 = sphi 0, %s33
      %s50 = sphi 0, %s34
      %s54 = sphi 0, %s54
      %s56 = sphi 0, %s54
      %s57 = sphi 0, %s56
      %s71 = sphi 0, %s57
      %s75 = sphi 0, %s75
      %s77 = sphi 0, %s75
      %s78 = sphi 0, %s77
      %s92 = sphi 0, %s78
      %s96 = sphi 0, %s96
      %s98 = sphi 0, %s96
      %s99 = sphi 0, %s98
      %s113 = sphi 0, %s99
      %s117 = sphi 0, %s117
      %s119 = sphi 0, %s117
      %s120 = sphi 0, %s119
      %s134 = sphi 0, %s120
      %s138 = sphi 0, %s138
      %s140 = sphi 0, %s138
      %s141 = sphi 0, %s140
      %s155 = sphi 0, %s141
      %s159 = sphi 0, %s159
      %s161 = sphi 0, %s159
      %s162 = sphi 0, %s161
      %s176 = sphi 0, %s162
      %s180 = sphi 0, %s180
      %s182 = sphi 0, %s180
      %s183 = sphi 0, %s182
      %s197 = sphi 0, %s183
      %s201 = sphi 0, %s201
      %s203 = sphi 0, %s201
      %s204 = sphi 0, %s203
      %s218 = sphi 0, %s204
      %s222 = sphi 0, %s222
      %s224 = sphi 0, %s222
      %s225 = sphi 0, %s224
      %s239 = sphi 0, %s225
      %s243 = sphi 0, %s243
      %s245 = sphi 0, %s243
      %s246 = sphi 0, %s245
      %s260 = sphi 0, %s246
      %s266 = sphi 0, %s268
      %s269 = sphi 0, %s266
      %s270 = sphi 0, %s269
      %s286 = sphi 0, %s270
    $region4: #{tpu_custom_call.1} parent=1 // loop_header_branch
      %23 = sbr.rel (%p21) target = $region8
    $region5: #{tpu_custom_call.1} parent=1 // loop_body
      %s25 = ssub.s32 %s20, 1
      %s26 = ssub.s32 %s20, 2
      %s27 = sadd.s32 %s20, 1
      %s28 = ssub.s32 %s20, %s27
      %p29 = scmp.eq.s32.totalorder %s28, 0
      %s31 = sadd.s32 %s30, 1
      %s32 = scalar_select %p29, %s30, %s31
      %p35 = pneg %p29
      %p36 = scmp.eq.s32.totalorder %s20, 1
      %p37 = por %p35, %p36
      %p38 = scmp.ne.s32.totalorder %s30, %s33
      %p39 = scmp.eq.s32.totalorder %s20, 0
      %p40 = por %p38, %p39
      %p41 = scmp.ne.s32.totalorder %s30, %s33
      %p42 = scmp.eq.s32.totalorder %s25, 1
      %p43 = por %p41, %p42
      %p44 = scmp.ne.s32.totalorder %s33, %s34
      %p45 = scmp.eq.s32.totalorder %s25, 0
      %p46 = por %p44, %p45
      %p47 = scmp.ne.s32.totalorder %s33, %s34
      %p48 = scmp.eq.s32.totalorder %s26, 1
      %p49 = por %p47, %p48
      %p51 = scmp.ne.s32.totalorder %s34, %s50
      %p52 = scmp.eq.s32.totalorder %s26, 0
      %p53 = por %p51, %p52
      %s55 = sadd.s32 %s54, 1
      %p58 = scmp.eq.s32.totalorder %s20, 1
      %p59 = scmp.ne.s32.totalorder %s54, %s56
      %p60 = scmp.eq.s32.totalorder %s20, 0
      %p61 = por %p59, %p60
      %p62 = scmp.ne.s32.totalorder %s54, %s56
      %p63 = scmp.eq.s32.totalorder %s25, 1
      %p64 = por %p62, %p63
      %p65 = scmp.ne.s32.totalorder %s56, %s57
      %p66 = scmp.eq.s32.totalorder %s25, 0
      %p67 = por %p65, %p66
      %p68 = scmp.ne.s32.totalorder %s56, %s57
      %p69 = scmp.eq.s32.totalorder %s26, 1
      %p70 = por %p68, %p69
      %p72 = scmp.ne.s32.totalorder %s57, %s71
      %p73 = scmp.eq.s32.totalorder %s26, 0
      %p74 = por %p72, %p73
      %s76 = sadd.s32 %s75, 1
      %p79 = scmp.eq.s32.totalorder %s20, 1
      %p80 = scmp.ne.s32.totalorder %s75, %s77
      %p81 = scmp.eq.s32.totalorder %s20, 0
      %p82 = por %p80, %p81
      %p83 = scmp.ne.s32.totalorder %s75, %s77
      %p84 = scmp.eq.s32.totalorder %s25, 1
      %p85 = por %p83, %p84
      %p86 = scmp.ne.s32.totalorder %s77, %s78
      %p87 = scmp.eq.s32.totalorder %s25, 0
      %p88 = por %p86, %p87
      %p89 = scmp.ne.s32.totalorder %s77, %s78
      %p90 = scmp.eq.s32.totalorder %s26, 1
      %p91 = por %p89, %p90
      %p93 = scmp.ne.s32.totalorder %s78, %s92
      %p94 = scmp.eq.s32.totalorder %s26, 0
      %p95 = por %p93, %p94
      %s97 = sadd.s32 %s96, 1
      %p100 = scmp.eq.s32.totalorder %s20, 1
      %p101 = scmp.ne.s32.totalorder %s96, %s98
      %p102 = scmp.eq.s32.totalorder %s20, 0
      %p103 = por %p101, %p102
      %p104 = scmp.ne.s32.totalorder %s96, %s98
      %p105 = scmp.eq.s32.totalorder %s25, 1
      %p106 = por %p104, %p105
      %p107 = scmp.ne.s32.totalorder %s98, %s99
      %p108 = scmp.eq.s32.totalorder %s25, 0
      %p109 = por %p107, %p108
      %p110 = scmp.ne.s32.totalorder %s98, %s99
      %p111 = scmp.eq.s32.totalorder %s26, 1
      %p112 = por %p110, %p111
      %p114 = scmp.ne.s32.totalorder %s99, %s113
      %p115 = scmp.eq.s32.totalorder %s26, 0
      %p116 = por %p114, %p115
      %s118 = sadd.s32 %s117, 1
      %p121 = scmp.eq.s32.totalorder %s20, 1
      %p122 = scmp.ne.s32.totalorder %s117, %s119
      %p123 = scmp.eq.s32.totalorder %s20, 0
      %p124 = por %p122, %p123
      %p125 = scmp.ne.s32.totalorder %s117, %s119
      %p126 = scmp.eq.s32.totalorder %s25, 1
      %p127 = por %p125, %p126
      %p128 = scmp.ne.s32.totalorder %s119, %s120
      %p129 = scmp.eq.s32.totalorder %s25, 0
      %p130 = por %p128, %p129
      %p131 = scmp.ne.s32.totalorder %s119, %s120
      %p132 = scmp.eq.s32.totalorder %s26, 1
      %p133 = por %p131, %p132
      %p135 = scmp.ne.s32.totalorder %s120, %s134
      %p136 = scmp.eq.s32.totalorder %s26, 0
      %p137 = por %p135, %p136
      %s139 = sadd.s32 %s138, 1
      %p142 = scmp.eq.s32.totalorder %s20, 1
      %p143 = scmp.ne.s32.totalorder %s138, %s140
      %p144 = scmp.eq.s32.totalorder %s20, 0
      %p145 = por %p143, %p144
      %p146 = scmp.ne.s32.totalorder %s138, %s140
      %p147 = scmp.eq.s32.totalorder %s25, 1
      %p148 = por %p146, %p147
      %p149 = scmp.ne.s32.totalorder %s140, %s141
      %p150 = scmp.eq.s32.totalorder %s25, 0
      %p151 = por %p149, %p150
      %p152 = scmp.ne.s32.totalorder %s140, %s141
      %p153 = scmp.eq.s32.totalorder %s26, 1
      %p154 = por %p152, %p153
      %p156 = scmp.ne.s32.totalorder %s141, %s155
      %p157 = scmp.eq.s32.totalorder %s26, 0
      %p158 = por %p156, %p157
      %s160 = sadd.s32 %s159, 1
      %p163 = scmp.eq.s32.totalorder %s20, 1
      %p164 = scmp.ne.s32.totalorder %s159, %s161
      %p165 = scmp.eq.s32.totalorder %s20, 0
      %p166 = por %p164, %p165
      %p167 = scmp.ne.s32.totalorder %s159, %s161
      %p168 = scmp.eq.s32.totalorder %s25, 1
      %p169 = por %p167, %p168
      %p170 = scmp.ne.s32.totalorder %s161, %s162
      %p171 = scmp.eq.s32.totalorder %s25, 0
      %p172 = por %p170, %p171
      %p173 = scmp.ne.s32.totalorder %s161, %s162
      %p174 = scmp.eq.s32.totalorder %s26, 1
      %p175 = por %p173, %p174
      %p177 = scmp.ne.s32.totalorder %s162, %s176
      %p178 = scmp.eq.s32.totalorder %s26, 0
      %p179 = por %p177, %p178
      %s181 = sadd.s32 %s180, 1
      %p184 = scmp.eq.s32.totalorder %s20, 1
      %p185 = scmp.ne.s32.totalorder %s180, %s182
      %p186 = scmp.eq.s32.totalorder %s20, 0
      %p187 = por %p185, %p186
      %p188 = scmp.ne.s32.totalorder %s180, %s182
      %p189 = scmp.eq.s32.totalorder %s25, 1
      %p190 = por %p188, %p189
      %p191 = scmp.ne.s32.totalorder %s182, %s183
      %p192 = scmp.eq.s32.totalorder %s25, 0
      %p193 = por %p191, %p192
      %p194 = scmp.ne.s32.totalorder %s182, %s183
      %p195 = scmp.eq.s32.totalorder %s26, 1
      %p196 = por %p194, %p195
      %p198 = scmp.ne.s32.totalorder %s183, %s197
      %p199 = scmp.eq.s32.totalorder %s26, 0
      %p200 = por %p198, %p199
      %s202 = sadd.s32 %s201, 1
      %p205 = scmp.eq.s32.totalorder %s20, 1
      %p206 = scmp.ne.s32.totalorder %s201, %s203
      %p207 = scmp.eq.s32.totalorder %s20, 0
      %p208 = por %p206, %p207
      %p209 = scmp.ne.s32.totalorder %s201, %s203
      %p210 = scmp.eq.s32.totalorder %s25, 1
      %p211 = por %p209, %p210
      %p212 = scmp.ne.s32.totalorder %s203, %s204
      %p213 = scmp.eq.s32.totalorder %s25, 0
      %p214 = por %p212, %p213
      %p215 = scmp.ne.s32.totalorder %s203, %s204
      %p216 = scmp.eq.s32.totalorder %s26, 1
      %p217 = por %p215, %p216
      %p219 = scmp.ne.s32.totalorder %s204, %s218
      %p220 = scmp.eq.s32.totalorder %s26, 0
      %p221 = por %p219, %p220
      %s223 = sadd.s32 %s222, 1
      %p226 = scmp.eq.s32.totalorder %s20, 1
      %p227 = scmp.ne.s32.totalorder %s222, %s224
      %p228 = scmp.eq.s32.totalorder %s20, 0
      %p229 = por %p227, %p228
      %p230 = scmp.ne.s32.totalorder %s222, %s224
      %p231 = scmp.eq.s32.totalorder %s25, 1
      %p232 = por %p230, %p231
      %p233 = scmp.ne.s32.totalorder %s224, %s225
      %p234 = scmp.eq.s32.totalorder %s25, 0
      %p235 = por %p233, %p234
      %p236 = scmp.ne.s32.totalorder %s224, %s225
      %p237 = scmp.eq.s32.totalorder %s26, 1
      %p238 = por %p236, %p237
      %p240 = scmp.ne.s32.totalorder %s225, %s239
      %p241 = scmp.eq.s32.totalorder %s26, 0
      %p242 = por %p240, %p241
      %s244 = sadd.s32 %s243, 1
      %p247 = scmp.eq.s32.totalorder %s20, 1
      %p248 = scmp.ne.s32.totalorder %s243, %s245
      %p249 = scmp.eq.s32.totalorder %s20, 0
      %p250 = por %p248, %p249
      %p251 = scmp.ne.s32.totalorder %s243, %s245
      %p252 = scmp.eq.s32.totalorder %s25, 1
      %p253 = por %p251, %p252
      %p254 = scmp.ne.s32.totalorder %s245, %s246
      %p255 = scmp.eq.s32.totalorder %s25, 0
      %p256 = por %p254, %p255
      %p257 = scmp.ne.s32.totalorder %s245, %s246
      %p258 = scmp.eq.s32.totalorder %s26, 1
      %p259 = por %p257, %p258
      %p261 = scmp.ne.s32.totalorder %s246, %s260
      %p262 = scmp.eq.s32.totalorder %s26, 0
      %p263 = por %p261, %p262
      %s264 = ssub.s32 %s20, %s27
      %p265 = scmp.eq.s32.totalorder %s264, 0
      %s267 = sadd.s32 %s266, 1
      %s268 = scalar_select %p265, %s266, %s267
      %p271 = pneg %p265
      %p272 = scmp.eq.s32.totalorder %s20, 1
      %p273 = por %p271, %p272
      %p274 = scmp.ne.s32.totalorder %s266, %s269
      %p275 = scmp.eq.s32.totalorder %s20, 0
      %p276 = por %p274, %p275
      %p277 = scmp.ne.s32.totalorder %s266, %s269
      %p278 = scmp.eq.s32.totalorder %s25, 1
      %p279 = por %p277, %p278
      %p280 = scmp.ne.s32.totalorder %s269, %s270
      %p281 = scmp.eq.s32.totalorder %s25, 0
      %p282 = por %p280, %p281
      %p283 = scmp.ne.s32.totalorder %s269, %s270
      %p284 = scmp.eq.s32.totalorder %s26, 1
      %p285 = por %p283, %p284
      %p287 = scmp.ne.s32.totalorder %s270, %s286
      %p288 = scmp.eq.s32.totalorder %s26, 0
      %p289 = por %p287, %p288
      %p290 = scmp.le.s32.totalorder 1, %s20
      %p291 = scmp.lt.s32.totalorder %s20, 3
      %p292 = pnand %p290, %p291
      %p293 = pneg %p292
      // Predicated region
      $region9: #{tpu_custom_call.1} parent=5 // pred_check
        _
      $region10: #{tpu_custom_call.1} parent=5 // pred_check_branch
        %295 = sbr.rel (%p292) target = $region12
      $region11: #{tpu_custom_call.1} parent=5 // pred_region
        %s296 = ssub.s32 %s20, 1
        // Predicated region
        $region13: #{tpu_custom_call.1} parent=11 // pred_check
          %p297 = pneg %p67
        $region14: #{tpu_custom_call.1} parent=11 // pred_check_branch
          %299 = sbr.rel (%p297) target = $region16
        $region15: #{tpu_custom_call.1} parent=11 // pred_region
          _
        $region16: #{tpu_custom_call.1} parent=11 // pred_fallthru
          _
        // Predicated region
        $region17: #{tpu_custom_call.1} parent=11 // pred_check
          %p300 = pneg %p88
        $region18: #{tpu_custom_call.1} parent=11 // pred_check_branch
          %302 = sbr.rel (%p300) target = $region20
        $region19: #{tpu_custom_call.1} parent=11 // pred_region
          _
        $region20: #{tpu_custom_call.1} parent=11 // pred_fallthru
          _
        // Predicated region
        $region21: #{tpu_custom_call.1} parent=11 // pred_check
          %p303 = pneg %p109
        $region22: #{tpu_custom_call.1} parent=11 // pred_check_branch
          %305 = sbr.rel (%p303) target = $region24
        $region23: #{tpu_custom_call.1} parent=11 // pred_region
          _
        $region24: #{tpu_custom_call.1} parent=11 // pred_fallthru
          _
        // Predicated region
        $region25: #{tpu_custom_call.1} parent=11 // pred_check
          %p306 = pneg %p130
        $region26: #{tpu_custom_call.1} parent=11 // pred_check_branch
          %308 = sbr.rel (%p306) target = $region28
        $region27: #{tpu_custom_call.1} parent=11 // pred_region
          _
        $region28: #{tpu_custom_call.1} parent=11 // pred_fallthru
          _
        // Predicated region
        $region29: #{tpu_custom_call.1} parent=11 // pred_check
          %p309 = pneg %p151
        $region30: #{tpu_custom_call.1} parent=11 // pred_check_branch
          %311 = sbr.rel (%p309) target = $region32
        $region31: #{tpu_custom_call.1} parent=11 // pred_region
          _
        $region32: #{tpu_custom_call.1} parent=11 // pred_fallthru
          _
        // Predicated region
        $region33: #{tpu_custom_call.1} parent=11 // pred_check
          %p312 = pneg %p172
        $region34: #{tpu_custom_call.1} parent=11 // pred_check_branch
          %314 = sbr.rel (%p312) target = $region36
        $region35: #{tpu_custom_call.1} parent=11 // pred_region
          _
        $region36: #{tpu_custom_call.1} parent=11 // pred_fallthru
          _
        // Predicated region
        $region37: #{tpu_custom_call.1} parent=11 // pred_check
          %p315 = pneg %p193
        $region38: #{tpu_custom_call.1} parent=11 // pred_check_branch
          %317 = sbr.rel (%p315) target = $region40
        $region39: #{tpu_custom_call.1} parent=11 // pred_region
          _
        $region40: #{tpu_custom_call.1} parent=11 // pred_fallthru
          _
        // Predicated region
        $region41: #{tpu_custom_call.1} parent=11 // pred_check
          %p318 = pneg %p214
        $region42: #{tpu_custom_call.1} parent=11 // pred_check_branch
          %320 = sbr.rel (%p318) target = $region44
        $region43: #{tpu_custom_call.1} parent=11 // pred_region
          _
        $region44: #{tpu_custom_call.1} parent=11 // pred_fallthru
          _
        // Predicated region
        $region45: #{tpu_custom_call.1} parent=11 // pred_check
          %p321 = pneg %p235
        $region46: #{tpu_custom_call.1} parent=11 // pred_check_branch
          %323 = sbr.rel (%p321) target = $region48
        $region47: #{tpu_custom_call.1} parent=11 // pred_region
          _
        $region48: #{tpu_custom_call.1} parent=11 // pred_fallthru
          _
        // Predicated region
        $region49: #{tpu_custom_call.1} parent=11 // pred_check
          %p324 = pneg %p256
        $region50: #{tpu_custom_call.1} parent=11 // pred_check_branch
          %326 = sbr.rel (%p324) target = $region52
        $region51: #{tpu_custom_call.1} parent=11 // pred_region
          _
        $region52: #{tpu_custom_call.1} parent=11 // pred_fallthru
          _
      $region12: #{tpu_custom_call.1} parent=5 // pred_fallthru
        _
      %p327 = scmp.lt.s32.totalorder %s20, 2
      // Predicated region
      $region53: #{tpu_custom_call.1} parent=5 // pred_check
        %p328 = pneg %p327
      $region54: #{tpu_custom_call.1} parent=5 // pred_check_branch
        %330 = sbr.rel (%p328) target = $region56
      $region55: #{tpu_custom_call.1} parent=5 // pred_region
        // Predicated region
        $region57: #{tpu_custom_call.1} parent=55 // pred_check
          %p331 = pneg %p40
        $region58: #{tpu_custom_call.1} parent=55 // pred_check_branch
          %333 = sbr.rel (%p331) target = $region60
        $region59: #{tpu_custom_call.1} parent=55 // pred_region
          %p334 = scmp.lt.s32.totalorder %s20, 1
          %s335 = scalar_select %p334, %s20, 1
          %s336 = smul.addr %s335, 4
          %s337 = smul.addr %s336, 4
          %s338 = scalar_lea.vmem %s0, %s337
        $region60: #{tpu_custom_call.1} parent=55 // pred_fallthru
          _
      $region56: #{tpu_custom_call.1} parent=5 // pred_fallthru
        _
      %p339 = scmp.le.s32.totalorder 1, %s20
      %p340 = scmp.lt.s32.totalorder %s20, 3
      %p341 = pnand %p339, %p340
      %p342 = pneg %p341
      // Predicated region
      $region61: #{tpu_custom_call.1} parent=5 // pred_check
        _
      $region62: #{tpu_custom_call.1} parent=5 // pred_check_branch
        %344 = sbr.rel (%p341) target = $region64
      $region63: #{tpu_custom_call.1} parent=5 // pred_region
        %s345 = ssub.s32 %s20, 1
        %p346 = scmp.lt.s32.totalorder %s25, 1
        %s347 = scalar_select %p346, %s25, 1
        %s348 = smul.addr %s347, 4
        %s349 = smul.addr %s348, 4
        %s350 = scalar_lea.vmem %s0, %s349
        %p351 = pneg %p46
        %p352 = pneg %p43
        %p353 = pneg %p67
        %p354 = pneg %p64
        %p355 = pneg %p88
        %p356 = pneg %p85
        %p357 = pneg %p109
        %p358 = pneg %p106
        %p359 = pneg %p130
        %p360 = pneg %p127
        %p361 = pneg %p151
        %p362 = pneg %p148
        %p363 = pneg %p172
        %p364 = pneg %p169
        %p365 = pneg %p193
        %p366 = pneg %p190
        %p367 = pneg %p214
        %p368 = pneg %p211
        %p369 = pneg %p235
        %p370 = pneg %p232
        %p371 = pneg %p256
        %p372 = pneg %p253
        %p373 = pneg %p282
        %p374 = pneg %p279
        %s375 = sand.u32 %s269, 1
        %s376 = scalar_lea.sflag [#allocation3], %s375
        %s377 = sand.u32 %s269, 1
        %s378 = smul.addr %s377, 128
        %s379 = scalar_lea.vmem [#allocation2], %s378
        %p380 = scmp.lt.s32.totalorder %s25, 1
        %s381 = scalar_select %p380, %s25, 1
        %s382 = smul.addr %s381, 4
        %s383 = smul.addr %s382, 4
        %s384 = scalar_lea.vmem %s0, %s383
        %v385 = vld [vmem:[%s384] sm:$0xff]
        %v386 = vld [vmem:[%s384 + $0x8] sm:$0xff]
        %v387 = vld [vmem:[%s1] sm:$0xf]
        %v388 = vld [vmem:[%s3] sm:$0xff]
        %v389 = vld [vmem:[%s3 + $0x8] sm:$0xff]
        %v390 = vld [vmem:[%s4] sm:$0xff]
        %v391 = vld [vmem:[%s4 + $0x8] sm:$0xff]
        %393 = vset.pattern.permute.xlu0 0
        %394 = vperm.xlu0 %393, %v390
        %v395 = vpop.permute.xlu0 %394
        %398 = vset.pattern.permute.xlu0 0
        %399 = vperm.xlu0 %398, %v391
        %v400 = vpop.permute.xlu0 %399
        %v404 = vcombine.high %v385, %v385
        %v405 = vcombine.high %v386, %v386
        %vm406 = vcmask 31744
        %v408 = vsel %vm406, %v388, 0
        %v411 = vsel %vm406, %v389, 0
        %vm413 = vcmask 1043456
        %v414 = vsel %vm413, %v385, 0
        %v416 = vsel %vm413, %v404, 0
        %v418 = vsel %vm413, %v386, 0
        %v420 = vsel %vm413, %v405, 0
        %422 = vmatprep.subr.mxu0 0.0
        %423 = vmatpush1.msra.mxu0 0.0
        %424 = vmatprep.subr.mxu0 0.0
        %425 = vmatpush1.msra.mxu0 0.0
        %426 = vmatprep.subr.mxu0 0.0
        %427 = vmatpush1.msra.mxu0 0.0
        %428 = vmatprep.subr.mxu0 0.0
        %429 = vmatpush1.msra.mxu0 0.0
        %430 = vmatprep.subr.mxu0 0.0
        %431 = vmatpush1.msra.mxu0 0.0
        %432 = vmatprep.subr.mxu0 0.0
        %433 = vmatpush1.msra.mxu0 0.0
        %434 = vmatprep.subr.mxu0 0.0
        %435 = vmatpush1.msra.mxu0 0.0
        %436 = vmatprep.subr.mxu0 0.0
        %437 = vmatpush1.msra.mxu0 0.0
        %438 = vmatprep.subr.mxu0 0.0
        %439 = vmatpush1.msra.mxu0 0.0
        %440 = vmatprep.subr.mxu0 0.0
        %441 = vmatpush1.msra.mxu0 0.0
        %442 = vmatprep.subr.mxu0 0.0
        %443 = vmatpush1.msra.mxu0 0.0
        %444 = vmatprep.subr.mxu0 0.0
        %445 = vmatpush1.msra.mxu0 0.0
        %446 = vmatprep.subr.mxu0 0.0
        %447 = vmatpush1.msra.mxu0 0.0
        %448 = vmatprep.subr.mxu0 0.0
        %449 = vmatpush1.msra.mxu0 0.0
        %450 = vmatprep.subr.mxu0 0.0
        %451 = vmatpush1.msra.mxu0 0.0
        %452 = vmatprep.subr.mxu0 %v416
        %453 = vmatpush1.msra.mxu0 %v414
        %454 = vmatprep.subr.mxu0 0.0
        %455 = vmatpush2.msra.mxu0 0.0
        %456 = vmatprep.subr.mxu0 0.0
        %457 = vmatpush2.msra.mxu0 0.0
        %458 = vmatprep.subr.mxu0 0.0
        %459 = vmatpush2.msra.mxu0 0.0
        %460 = vmatprep.subr.mxu0 0.0
        %461 = vmatpush2.msra.mxu0 0.0
        %462 = vmatprep.subr.mxu0 0.0
        %463 = vmatpush2.msra.mxu0 0.0
        %464 = vmatprep.subr.mxu0 0.0
        %465 = vmatpush2.msra.mxu0 0.0
        %466 = vmatprep.subr.mxu0 0.0
        %467 = vmatpush2.msra.mxu0 0.0
        %468 = vmatprep.subr.mxu0 0.0
        %469 = vmatpush2.msra.mxu0 0.0
        %470 = vmatprep.subr.mxu0 0.0
        %471 = vmatpush2.msra.mxu0 0.0
        %472 = vmatprep.subr.mxu0 0.0
        %473 = vmatpush2.msra.mxu0 0.0
        %474 = vmatprep.subr.mxu0 0.0
        %475 = vmatpush2.msra.mxu0 0.0
        %476 = vmatprep.subr.mxu0 0.0
        %477 = vmatpush2.msra.mxu0 0.0
        %478 = vmatprep.subr.mxu0 0.0
        %479 = vmatpush2.msra.mxu0 0.0
        %480 = vmatprep.subr.mxu0 0.0
        %481 = vmatpush2.msra.mxu0 0.0
        %482 = vmatprep.subr.mxu0 0.0
        %483 = vmatpush2.msra.mxu0 0.0
        %484 = vmatprep.subr.mxu0 0.0
        %485 = vmatpush2.msra.mxu0 0.0
        %486 = vmatprep.mubr.f32.mxu0 0.0
        %487 = vmatmul.mubr.f32.gmra.mxu0 %v408
        %v488 = vpop.f32.mrf.mxu0
        %v489 = vadd.f32 %v395, %v488
        %v490 = vpop.f32.mrf.mxu0
        %v491 = vadd.f32 %v395, %v490
        %492 = vmatprep.mubr.f32.mxu0 0.0
        %493 = vmatmul.mubr.f32.gmra.mxu0 %v411
        %v494 = vpop.f32.mrf.mxu0
        %v495 = vadd.f32 %v400, %v494
        %v496 = vpop.f32.mrf.mxu0
        %v497 = vadd.f32 %v400, %v496
        %498 = vdwg.mxu0
        %499 = vmatprep.subr.mxu0 0.0
        %500 = vmatpush1.msra.mxu0 0.0
        %501 = vmatprep.subr.mxu0 0.0
        %502 = vmatpush1.msra.mxu0 0.0
        %503 = vmatprep.subr.mxu0 0.0
        %504 = vmatpush1.msra.mxu0 0.0
        %505 = vmatprep.subr.mxu0 0.0
        %506 = vmatpush1.msra.mxu0 0.0
        %507 = vmatprep.subr.mxu0 0.0
        %508 = vmatpush1.msra.mxu0 0.0
        %509 = vmatprep.subr.mxu0 0.0
        %510 = vmatpush1.msra.mxu0 0.0
        %511 = vmatprep.subr.mxu0 0.0
        %512 = vmatpush1.msra.mxu0 0.0
        %513 = vmatprep.subr.mxu0 0.0
        %514 = vmatpush1.msra.mxu0 0.0
        %515 = vmatprep.subr.mxu0 0.0
        %516 = vmatpush1.msra.mxu0 0.0
        %517 = vmatprep.subr.mxu0 0.0
        %518 = vmatpush1.msra.mxu0 0.0
        %519 = vmatprep.subr.mxu0 0.0
        %520 = vmatpush1.msra.mxu0 0.0
        %521 = vmatprep.subr.mxu0 0.0
        %522 = vmatpush1.msra.mxu0 0.0
        %523 = vmatprep.subr.mxu0 0.0
        %524 = vmatpush1.msra.mxu0 0.0
        %525 = vmatprep.subr.mxu0 0.0
        %526 = vmatpush1.msra.mxu0 0.0
        %527 = vmatprep.subr.mxu0 0.0
        %528 = vmatpush1.msra.mxu0 0.0
        %529 = vmatprep.subr.mxu0 %v420
        %530 = vmatpush1.msra.mxu0 %v418
        %531 = vmatprep.subr.mxu0 0.0
        %532 = vmatpush2.msra.mxu0 0.0
        %533 = vmatprep.subr.mxu0 0.0
        %534 = vmatpush2.msra.mxu0 0.0
        %535 = vmatprep.subr.mxu0 0.0
        %536 = vmatpush2.msra.mxu0 0.0
        %537 = vmatprep.subr.mxu0 0.0
        %538 = vmatpush2.msra.mxu0 0.0
        %539 = vmatprep.subr.mxu0 0.0
        %540 = vmatpush2.msra.mxu0 0.0
        %541 = vmatprep.subr.mxu0 0.0
        %542 = vmatpush2.msra.mxu0 0.0
        %543 = vmatprep.subr.mxu0 0.0
        %544 = vmatpush2.msra.mxu0 0.0
        %545 = vmatprep.subr.mxu0 0.0
        %546 = vmatpush2.msra.mxu0 0.0
        %547 = vmatprep.subr.mxu0 0.0
        %548 = vmatpush2.msra.mxu0 0.0
        %549 = vmatprep.subr.mxu0 0.0
        %550 = vmatpush2.msra.mxu0 0.0
        %551 = vmatprep.subr.mxu0 0.0
        %552 = vmatpush2.msra.mxu0 0.0
        %553 = vmatprep.subr.mxu0 0.0
        %554 = vmatpush2.msra.mxu0 0.0
        %555 = vmatprep.subr.mxu0 0.0
        %556 = vmatpush2.msra.mxu0 0.0
        %557 = vmatprep.subr.mxu0 0.0
        %558 = vmatpush2.msra.mxu0 0.0
        %559 = vmatprep.subr.mxu0 0.0
        %560 = vmatpush2.msra.mxu0 0.0
        %561 = vmatprep.subr.mxu0 0.0
        %562 = vmatpush2.msra.mxu0 0.0
        %563 = vmatprep.mubr.f32.mxu0 0.0
        %564 = vmatmul.mubr.f32.gmra.mxu0 %v408
        %v565 = vpop.f32.mrf.mxu0
        %v566 = vadd.f32 %v395, %v565
        %v567 = vpop.f32.mrf.mxu0
        %v568 = vadd.f32 %v395, %v567
        %569 = vmatprep.mubr.f32.mxu0 0.0
        %570 = vmatmul.mubr.f32.gmra.mxu0 %v411
        %v571 = vpop.f32.mrf.mxu0
        %v572 = vadd.f32 %v400, %v571
        %v573 = vpop.f32.mrf.mxu0
        %v574 = vadd.f32 %v400, %v573
        %575 = vdwg.mxu0
        %v576 = vmax.f32 %v489, 0.0
        %v577 = vmax.f32 %v491, 0.0
        %v578 = vmax.f32 %v566, 0.0
        %v579 = vmax.f32 %v568, 0.0
        %v580 = vmax.f32 %v495, 0.0
        %v581 = vmax.f32 %v497, 0.0
        %v582 = vmax.f32 %v572, 0.0
        %v583 = vmax.f32 %v574, 0.0
        %v585 = vlaneseq
        %v586 = vshrl.u32 %v585, 7
        %v587 = vsub.s32 0, %v586
        %v588 = vrot.slane %v387, %v587
        %v589 = vlaneseq
        %v590 = vshrl.u32 %v589, 7
        %v591 = vsub.s32 1, %v590
        %v592 = vrot.slane %v387, %v591
        %v593 = vlaneseq
        %v594 = vshrl.u32 %v593, 7
        %v595 = vsub.s32 2, %v594
        %v596 = vrot.slane %v387, %v595
        %v597 = vlaneseq
        %v598 = vshrl.u32 %v597, 7
        %v599 = vsub.s32 3, %v598
        %v600 = vrot.slane %v387, %v599
        %v605 = vmul.f32 %v576, %v588
        %v606 = vmul.f32 %v577, %v592
        %v607 = vmul.f32 %v578, %v596
        %v608 = vmul.f32 %v579, %v600
        %v609 = vmul.f32 %v580, %v588
        %v610 = vmul.f32 %v581, %v592
        %v611 = vmul.f32 %v582, %v596
        %v612 = vmul.f32 %v583, %v600
        %v613 = vld [vmem:[%s5] sm:$0xff]
        %v614 = vld [vmem:[%s5 + $0x8] sm:$0xff]
        %v615 = vld [vmem:[%s5 + $0x10] sm:$0xff]
        %v616 = vld [vmem:[%s5 + $0x18] sm:$0xff]
        %v617 = vld [vmem:[%s5 + $0x20] sm:$0xff]
        %v618 = vld [vmem:[%s5 + $0x28] sm:$0xff]
        %v619 = vld [vmem:[%s5 + $0x30] sm:$0xff]
        %v620 = vld [vmem:[%s5 + $0x38] sm:$0xff]
        %v621 = vld [vmem:[%s5 + $0x40] sm:$0xff]
        %v623 = vsel %vm406, %v613, 0
        %v626 = vsel %vm406, %v614, 0
        %v629 = vsel %vm406, %v615, 0
        %v632 = vsel %vm406, %v616, 0
        %v635 = vsel %vm406, %v617, 0
        %v638 = vsel %vm406, %v618, 0
        %v641 = vsel %vm406, %v619, 0
        %v644 = vsel %vm406, %v620, 0
        %v647 = vsel %vm406, %v621, 0
        %v650 = vsel %vm413, %v609, 0
        %v653 = vsel %vm413, %v610, 0
        %v656 = vsel %vm413, %v611, 0
        %v659 = vsel %vm413, %v612, 0
        %661 = vmatprep.subr.mxu0 0.0
        %662 = vmatpush1.msra.mxu0 0.0
        %663 = vmatprep.subr.mxu0 0.0
        %664 = vmatpush1.msra.mxu0 0.0
        %665 = vmatprep.subr.mxu0 0.0
        %666 = vmatpush1.msra.mxu0 0.0
        %667 = vmatprep.subr.mxu0 0.0
        %668 = vmatpush1.msra.mxu0 0.0
        %669 = vmatprep.subr.mxu0 0.0
        %670 = vmatpush1.msra.mxu0 0.0
        %671 = vmatprep.subr.mxu0 0.0
        %672 = vmatpush1.msra.mxu0 0.0
        %673 = vmatprep.subr.mxu0 0.0
        %674 = vmatpush1.msra.mxu0 0.0
        %675 = vmatprep.subr.mxu0 0.0
        %676 = vmatpush1.msra.mxu0 0.0
        %677 = vmatprep.subr.mxu0 0.0
        %678 = vmatpush1.msra.mxu0 0.0
        %679 = vmatprep.subr.mxu0 0.0
        %680 = vmatpush1.msra.mxu0 0.0
        %681 = vmatprep.subr.mxu0 0.0
        %682 = vmatpush1.msra.mxu0 0.0
        %683 = vmatprep.subr.mxu0 0.0
        %684 = vmatpush1.msra.mxu0 0.0
        %685 = vmatprep.subr.mxu0 0.0
        %686 = vmatpush1.msra.mxu0 0.0
        %687 = vmatprep.subr.mxu0 0.0
        %688 = vmatpush1.msra.mxu0 0.0
        %689 = vmatprep.subr.mxu0 0.0
        %690 = vmatpush1.msra.mxu0 0.0
        %691 = vmatprep.subr.mxu0 %v653
        %692 = vmatpush1.msra.mxu0 %v650
        %693 = vmatprep.subr.mxu0 0.0
        %694 = vmatpush2.msra.mxu0 0.0
        %695 = vmatprep.subr.mxu0 0.0
        %696 = vmatpush2.msra.mxu0 0.0
        %697 = vmatprep.subr.mxu0 0.0
        %698 = vmatpush2.msra.mxu0 0.0
        %699 = vmatprep.subr.mxu0 0.0
        %700 = vmatpush2.msra.mxu0 0.0
        %701 = vmatprep.subr.mxu0 0.0
        %702 = vmatpush2.msra.mxu0 0.0
        %703 = vmatprep.subr.mxu0 0.0
        %704 = vmatpush2.msra.mxu0 0.0
        %705 = vmatprep.subr.mxu0 0.0
        %706 = vmatpush2.msra.mxu0 0.0
        %707 = vmatprep.subr.mxu0 0.0
        %708 = vmatpush2.msra.mxu0 0.0
        %709 = vmatprep.subr.mxu0 0.0
        %710 = vmatpush2.msra.mxu0 0.0
        %711 = vmatprep.subr.mxu0 0.0
        %712 = vmatpush2.msra.mxu0 0.0
        %713 = vmatprep.subr.mxu0 0.0
        %714 = vmatpush2.msra.mxu0 0.0
        %715 = vmatprep.subr.mxu0 0.0
        %716 = vmatpush2.msra.mxu0 0.0
        %717 = vmatprep.subr.mxu0 0.0
        %718 = vmatpush2.msra.mxu0 0.0
        %719 = vmatprep.subr.mxu0 0.0
        %720 = vmatpush2.msra.mxu0 0.0
        %721 = vmatprep.subr.mxu0 0.0
        %722 = vmatpush2.msra.mxu0 0.0
        %723 = vmatprep.subr.mxu0 0.0
        %724 = vmatpush2.msra.mxu0 0.0
        %725 = vmatprep.mubr.f32.mxu0 0.0
        %726 = vmatmul.mubr.f32.gmra.mxu0 %v623
        %v727 = vpop.f32.mrf.mxu0
        %v728 = vadd.f32 0.0, %v727
        %v729 = vpop.f32.mrf.mxu0
        %v730 = vadd.f32 0.0, %v729
        %731 = vmatprep.mubr.f32.mxu0 0.0
        %732 = vmatmul.mubr.f32.gmra.mxu0 %v626
        %v733 = vpop.f32.mrf.mxu0
        %v734 = vadd.f32 0.0, %v733
        %v735 = vpop.f32.mrf.mxu0
        %v736 = vadd.f32 0.0, %v735
        %737 = vmatprep.mubr.f32.mxu0 0.0
        %738 = vmatmul.mubr.f32.gmra.mxu0 %v629
        %v739 = vpop.f32.mrf.mxu0
        %v740 = vadd.f32 0.0, %v739
        %v741 = vpop.f32.mrf.mxu0
        %v742 = vadd.f32 0.0, %v741
        %743 = vmatprep.mubr.f32.mxu0 0.0
        %744 = vmatmul.mubr.f32.gmra.mxu0 %v632
        %v745 = vpop.f32.mrf.mxu0
        %v746 = vadd.f32 0.0, %v745
        %v747 = vpop.f32.mrf.mxu0
        %v748 = vadd.f32 0.0, %v747
        %749 = vmatprep.mubr.f32.mxu0 0.0
        %750 = vmatmul.mubr.f32.gmra.mxu0 %v635
        %v751 = vpop.f32.mrf.mxu0
        %v752 = vadd.f32 0.0, %v751
        %v753 = vpop.f32.mrf.mxu0
        %v754 = vadd.f32 0.0, %v753
        %755 = vmatprep.mubr.f32.mxu0 0.0
        %756 = vmatmul.mubr.f32.gmra.mxu0 %v638
        %v757 = vpop.f32.mrf.mxu0
        %v758 = vadd.f32 0.0, %v757
        %v759 = vpop.f32.mrf.mxu0
        %v760 = vadd.f32 0.0, %v759
        %761 = vmatprep.mubr.f32.mxu0 0.0
        %762 = vmatmul.mubr.f32.gmra.mxu0 %v641
        %v763 = vpop.f32.mrf.mxu0
        %v764 = vadd.f32 0.0, %v763
        %v765 = vpop.f32.mrf.mxu0
        %v766 = vadd.f32 0.0, %v765
        %767 = vmatprep.mubr.f32.mxu0 0.0
        %768 = vmatmul.mubr.f32.gmra.mxu0 %v644
        %v769 = vpop.f32.mrf.mxu0
        %v770 = vadd.f32 0.0, %v769
        %v771 = vpop.f32.mrf.mxu0
        %v772 = vadd.f32 0.0, %v771
        %773 = vmatprep.mubr.f32.mxu0 0.0
        %774 = vmatmul.mubr.f32.gmra.mxu0 %v647
        %v775 = vpop.f32.mrf.mxu0
        %v776 = vadd.f32 0.0, %v775
        %v777 = vpop.f32.mrf.mxu0
        %v778 = vadd.f32 0.0, %v777
        %779 = vdwg.mxu0
        %780 = vmatprep.subr.mxu0 0.0
        %781 = vmatpush1.msra.mxu0 0.0
        %782 = vmatprep.subr.mxu0 0.0
        %783 = vmatpush1.msra.mxu0 0.0
        %784 = vmatprep.subr.mxu0 0.0
        %785 = vmatpush1.msra.mxu0 0.0
        %786 = vmatprep.subr.mxu0 0.0
        %787 = vmatpush1.msra.mxu0 0.0
        %788 = vmatprep.subr.mxu0 0.0
        %789 = vmatpush1.msra.mxu0 0.0
        %790 = vmatprep.subr.mxu0 0.0
        %791 = vmatpush1.msra.mxu0 0.0
        %792 = vmatprep.subr.mxu0 0.0
        %793 = vmatpush1.msra.mxu0 0.0
        %794 = vmatprep.subr.mxu0 0.0
        %795 = vmatpush1.msra.mxu0 0.0
        %796 = vmatprep.subr.mxu0 0.0
        %797 = vmatpush1.msra.mxu0 0.0
        %798 = vmatprep.subr.mxu0 0.0
        %799 = vmatpush1.msra.mxu0 0.0
        %800 = vmatprep.subr.mxu0 0.0
        %801 = vmatpush1.msra.mxu0 0.0
        %802 = vmatprep.subr.mxu0 0.0
        %803 = vmatpush1.msra.mxu0 0.0
        %804 = vmatprep.subr.mxu0 0.0
        %805 = vmatpush1.msra.mxu0 0.0
        %806 = vmatprep.subr.mxu0 0.0
        %807 = vmatpush1.msra.mxu0 0.0
        %808 = vmatprep.subr.mxu0 0.0
        %809 = vmatpush1.msra.mxu0 0.0
        %810 = vmatprep.subr.mxu0 %v659
        %811 = vmatpush1.msra.mxu0 %v656
        %812 = vmatprep.subr.mxu0 0.0
        %813 = vmatpush2.msra.mxu0 0.0
        %814 = vmatprep.subr.mxu0 0.0
        %815 = vmatpush2.msra.mxu0 0.0
        %816 = vmatprep.subr.mxu0 0.0
        %817 = vmatpush2.msra.mxu0 0.0
        %818 = vmatprep.subr.mxu0 0.0
        %819 = vmatpush2.msra.mxu0 0.0
        %820 = vmatprep.subr.mxu0 0.0
        %821 = vmatpush2.msra.mxu0 0.0
        %822 = vmatprep.subr.mxu0 0.0
        %823 = vmatpush2.msra.mxu0 0.0
        %824 = vmatprep.subr.mxu0 0.0
        %825 = vmatpush2.msra.mxu0 0.0
        %826 = vmatprep.subr.mxu0 0.0
        %827 = vmatpush2.msra.mxu0 0.0
        %828 = vmatprep.subr.mxu0 0.0
        %829 = vmatpush2.msra.mxu0 0.0
        %830 = vmatprep.subr.mxu0 0.0
        %831 = vmatpush2.msra.mxu0 0.0
        %832 = vmatprep.subr.mxu0 0.0
        %833 = vmatpush2.msra.mxu0 0.0
        %834 = vmatprep.subr.mxu0 0.0
        %835 = vmatpush2.msra.mxu0 0.0
        %836 = vmatprep.subr.mxu0 0.0
        %837 = vmatpush2.msra.mxu0 0.0
        %838 = vmatprep.subr.mxu0 0.0
        %839 = vmatpush2.msra.mxu0 0.0
        %840 = vmatprep.subr.mxu0 0.0
        %841 = vmatpush2.msra.mxu0 0.0
        %842 = vmatprep.subr.mxu0 0.0
        %843 = vmatpush2.msra.mxu0 0.0
        %844 = vmatprep.mubr.f32.mxu0 0.0
        %845 = vmatmul.mubr.f32.gmra.mxu0 %v623
        %v846 = vpop.f32.mrf.mxu0
        %v847 = vadd.f32 0.0, %v846
        %v848 = vpop.f32.mrf.mxu0
        %v849 = vadd.f32 0.0, %v848
        %850 = vmatprep.mubr.f32.mxu0 0.0
        %851 = vmatmul.mubr.f32.gmra.mxu0 %v626
        %v852 = vpop.f32.mrf.mxu0
        %v853 = vadd.f32 0.0, %v852
        %v854 = vpop.f32.mrf.mxu0
        %v855 = vadd.f32 0.0, %v854
        %856 = vmatprep.mubr.f32.mxu0 0.0
        %857 = vmatmul.mubr.f32.gmra.mxu0 %v629
        %v858 = vpop.f32.mrf.mxu0
        %v859 = vadd.f32 0.0, %v858
        %v860 = vpop.f32.mrf.mxu0
        %v861 = vadd.f32 0.0, %v860
        %862 = vmatprep.mubr.f32.mxu0 0.0
        %863 = vmatmul.mubr.f32.gmra.mxu0 %v632
        %v864 = vpop.f32.mrf.mxu0
        %v865 = vadd.f32 0.0, %v864
        %v866 = vpop.f32.mrf.mxu0
        %v867 = vadd.f32 0.0, %v866
        %868 = vmatprep.mubr.f32.mxu0 0.0
        %869 = vmatmul.mubr.f32.gmra.mxu0 %v635
        %v870 = vpop.f32.mrf.mxu0
        %v871 = vadd.f32 0.0, %v870
        %v872 = vpop.f32.mrf.mxu0
        %v873 = vadd.f32 0.0, %v872
        %874 = vmatprep.mubr.f32.mxu0 0.0
        %875 = vmatmul.mubr.f32.gmra.mxu0 %v638
        %v876 = vpop.f32.mrf.mxu0
        %v877 = vadd.f32 0.0, %v876
        %v878 = vpop.f32.mrf.mxu0
        %v879 = vadd.f32 0.0, %v878
        %880 = vmatprep.mubr.f32.mxu0 0.0
        %881 = vmatmul.mubr.f32.gmra.mxu0 %v641
        %v882 = vpop.f32.mrf.mxu0
        %v883 = vadd.f32 0.0, %v882
        %v884 = vpop.f32.mrf.mxu0
        %v885 = vadd.f32 0.0, %v884
        %886 = vmatprep.mubr.f32.mxu0 0.0
        %887 = vmatmul.mubr.f32.gmra.mxu0 %v644
        %v888 = vpop.f32.mrf.mxu0
        %v889 = vadd.f32 0.0, %v888
        %v890 = vpop.f32.mrf.mxu0
        %v891 = vadd.f32 0.0, %v890
        %892 = vmatprep.mubr.f32.mxu0 0.0
        %893 = vmatmul.mubr.f32.gmra.mxu0 %v647
        %v894 = vpop.f32.mrf.mxu0
        %v895 = vadd.f32 0.0, %v894
        %v896 = vpop.f32.mrf.mxu0
        %v897 = vadd.f32 0.0, %v896
        %898 = vdwg.mxu0
        %v899 = vld [vmem:[%s6] sm:$0xff]
        %900 = vrot.lane.b32.xlu0 %v728, 21
        %v901 = vpop.permute.xlu0 %900
        %902 = vrot.lane.b32.xlu0 %v730, 21
        %v903 = vpop.permute.xlu0 %902
        %904 = vrot.lane.b32.xlu0 %v847, 21
        %v905 = vpop.permute.xlu0 %904
        %906 = vrot.lane.b32.xlu0 %v849, 21
        %v907 = vpop.permute.xlu0 %906
        %v908 = vlaneseq
        %v909 = vand.u32 %v908, 127
        %vm910 = vcmp.lt.s32.totalorder %v909, 21
        %v911 = vsel %vm910, %v905, %v907
        %v912 = vsel %vm910, %v903, %v905
        %v913 = vsel %vm910, %v901, %v903
        %v914 = vsel %vm910, %v907, %v901
        %916 = vset.pattern.permute.xlu0 0
        %917 = vperm.xlu0 %916, %v899
        %v918 = vpop.permute.xlu0 %917
        %v920 = vadd.f32 %v918, %v914
        %v921 = vadd.f32 %v918, %v913
        %v922 = vadd.f32 %v918, %v912
        %v923 = vadd.f32 %v918, %v911
        %924 = vrot.lane.b32.xlu0 %v734, 20
        %v925 = vpop.permute.xlu0 %924
        %926 = vrot.lane.b32.xlu0 %v736, 20
        %v927 = vpop.permute.xlu0 %926
        %928 = vrot.lane.b32.xlu0 %v853, 20
        %v929 = vpop.permute.xlu0 %928
        %930 = vrot.lane.b32.xlu0 %v855, 20
        %v931 = vpop.permute.xlu0 %930
        %vm932 = vcmp.lt.s32.totalorder %v909, 20
        %v933 = vsel %vm932, %v929, %v931
        %v934 = vsel %vm932, %v927, %v929
        %v935 = vsel %vm932, %v925, %v927
        %v936 = vsel %vm932, %v931, %v925
        %v937 = vadd.f32 %v920, %v936
        %v938 = vadd.f32 %v921, %v935
        %v939 = vadd.f32 %v922, %v934
        %v940 = vadd.f32 %v923, %v933
        %941 = vrot.lane.b32.xlu0 %v740, 19
        %v942 = vpop.permute.xlu0 %941
        %943 = vrot.lane.b32.xlu0 %v742, 19
        %v944 = vpop.permute.xlu0 %943
        %945 = vrot.lane.b32.xlu0 %v859, 19
        %v946 = vpop.permute.xlu0 %945
        %947 = vrot.lane.b32.xlu0 %v861, 19
        %v948 = vpop.permute.xlu0 %947
        %vm949 = vcmp.lt.s32.totalorder %v909, 19
        %v950 = vsel %vm949, %v946, %v948
        %v951 = vsel %vm949, %v944, %v946
        %v952 = vsel %vm949, %v942, %v944
        %v953 = vsel %vm949, %v948, %v942
        %v954 = vadd.f32 %v937, %v953
        %v955 = vadd.f32 %v938, %v952
        %v956 = vadd.f32 %v939, %v951
        %v957 = vadd.f32 %v940, %v950
        %958 = vrot.lane.b32.xlu0 %v746, 1
        %v959 = vpop.permute.xlu0 %958
        %960 = vrot.lane.b32.xlu0 %v748, 1
        %v961 = vpop.permute.xlu0 %960
        %962 = vrot.lane.b32.xlu0 %v865, 1
        %v963 = vpop.permute.xlu0 %962
        %964 = vrot.lane.b32.xlu0 %v867, 1
        %v965 = vpop.permute.xlu0 %964
        %vm966 = vcmp.lt.s32.totalorder %v909, 1
        %v967 = vsel %vm966, %v963, %v965
        %v968 = vsel %vm966, %v961, %v963
        %v969 = vsel %vm966, %v959, %v961
        %v970 = vsel %vm966, %v965, %v959
        %v971 = vadd.f32 %v954, %v970
        %v972 = vadd.f32 %v955, %v969
        %v973 = vadd.f32 %v956, %v968
        %v974 = vadd.f32 %v957, %v967
        %v975 = vadd.f32 %v971, %v752
        %v976 = vadd.f32 %v972, %v754
        %v977 = vadd.f32 %v973, %v871
        %v978 = vadd.f32 %v974, %v873
        %979 = vrot.lane.b32.xlu0 %v758, 127
        %v980 = vpop.permute.xlu0 %979
        %981 = vrot.lane.b32.xlu0 %v760, 127
        %v982 = vpop.permute.xlu0 %981
        %983 = vrot.lane.b32.xlu0 %v877, 127
        %v984 = vpop.permute.xlu0 %983
        %985 = vrot.lane.b32.xlu0 %v879, 127
        %v986 = vpop.permute.xlu0 %985
        %vm987 = vcmp.lt.s32.totalorder %v909, 127
        %v988 = vsel %vm987, %v984, %v986
        %v989 = vsel %vm987, %v982, %v984
        %v990 = vsel %vm987, %v980, %v982
        %v991 = vsel %vm987, %v986, %v980
        %v992 = vadd.f32 %v975, %v990
        %v993 = vadd.f32 %v976, %v989
        %v994 = vadd.f32 %v977, %v988
        %v995 = vadd.f32 %v978, %v991
        %996 = vrot.lane.b32.xlu0 %v764, 109
        %v997 = vpop.permute.xlu0 %996
        %998 = vrot.lane.b32.xlu0 %v766, 109
        %v999 = vpop.permute.xlu0 %998
        %1000 = vrot.lane.b32.xlu0 %v883, 109
        %v1001 = vpop.permute.xlu0 %1000
        %1002 = vrot.lane.b32.xlu0 %v885, 109
        %v1003 = vpop.permute.xlu0 %1002
        %vm1004 = vcmp.lt.s32.totalorder %v909, 109
        %v1005 = vsel %vm1004, %v1001, %v1003
        %v1006 = vsel %vm1004, %v999, %v1001
        %v1007 = vsel %vm1004, %v997, %v999
        %v1008 = vsel %vm1004, %v1003, %v997
        %v1009 = vadd.f32 %v992, %v1007
        %v1010 = vadd.f32 %v993, %v1006
        %v1011 = vadd.f32 %v994, %v1005
        %v1012 = vadd.f32 %v995, %v1008
        %1013 = vrot.lane.b32.xlu0 %v770, 108
        %v1014 = vpop.permute.xlu0 %1013
        %1015 = vrot.lane.b32.xlu0 %v772, 108
        %v1016 = vpop.permute.xlu0 %1015
        %1017 = vrot.lane.b32.xlu0 %v889, 108
        %v1018 = vpop.permute.xlu0 %1017
        %1019 = vrot.lane.b32.xlu0 %v891, 108
        %v1020 = vpop.permute.xlu0 %1019
        %vm1021 = vcmp.lt.s32.totalorder %v909, 108
        %v1022 = vsel %vm1021, %v1018, %v1020
        %v1023 = vsel %vm1021, %v1016, %v1018
        %v1024 = vsel %vm1021, %v1014, %v1016
        %v1025 = vsel %vm1021, %v1020, %v1014
        %v1026 = vadd.f32 %v1009, %v1024
        %v1027 = vadd.f32 %v1010, %v1023
        %v1028 = vadd.f32 %v1011, %v1022
        %v1029 = vadd.f32 %v1012, %v1025
        %1030 = vrot.lane.b32.xlu0 %v776, 107
        %v1031 = vpop.permute.xlu0 %1030
        %1032 = vrot.lane.b32.xlu0 %v778, 107
        %v1033 = vpop.permute.xlu0 %1032
        %1034 = vrot.lane.b32.xlu0 %v895, 107
        %v1035 = vpop.permute.xlu0 %1034
        %1036 = vrot.lane.b32.xlu0 %v897, 107
        %v1037 = vpop.permute.xlu0 %1036
        %vm1038 = vcmp.lt.s32.totalorder %v909, 107
        %v1039 = vsel %vm1038, %v1035, %v1037
        %v1040 = vsel %vm1038, %v1033, %v1035
        %v1041 = vsel %vm1038, %v1031, %v1033
        %v1042 = vsel %vm1038, %v1037, %v1031
        %v1043 = vadd.f32 %v1026, %v1041
        %v1044 = vadd.f32 %v1027, %v1040
        %v1045 = vadd.f32 %v1028, %v1039
        %v1046 = vadd.f32 %v1029, %v1042
        %v1047 = vmax.f32 %v1043, 0.0
        %v1048 = vmax.f32 %v1044, 0.0
        %v1049 = vmax.f32 %v1045, 0.0
        %v1050 = vmax.f32 %v1046, 0.0
        %v1051 = vld [vmem:[%s7] sm:$0xff]
        %v1052 = vld [vmem:[%s7 + $0x8] sm:$0xff]
        %v1053 = vld [vmem:[%s7 + $0x10] sm:$0xff]
        %v1054 = vld [vmem:[%s7 + $0x18] sm:$0xff]
        %v1055 = vld [vmem:[%s7 + $0x20] sm:$0xff]
        %v1056 = vld [vmem:[%s7 + $0x28] sm:$0xff]
        %v1057 = vld [vmem:[%s7 + $0x30] sm:$0xff]
        %v1058 = vld [vmem:[%s7 + $0x38] sm:$0xff]
        %v1059 = vld [vmem:[%s7 + $0x40] sm:$0xff]
        %v1060 = vld [vmem:[%s7 + $0x48] sm:$0xff]
        %v1061 = vld [vmem:[%s7 + $0x50] sm:$0xff]
        %v1062 = vld [vmem:[%s7 + $0x58] sm:$0xff]
        %v1063 = vld [vmem:[%s7 + $0x60] sm:$0xff]
        %v1064 = vld [vmem:[%s7 + $0x68] sm:$0xff]
        %v1065 = vld [vmem:[%s7 + $0x70] sm:$0xff]
        %v1066 = vld [vmem:[%s7 + $0x78] sm:$0xff]
        %v1067 = vld [vmem:[%s7 + $0x80] sm:$0xff]
        %v1068 = vld [vmem:[%s7 + $0x88] sm:$0xff]
        %v1069 = vld [vmem:[%s7 + $0x90] sm:$0xff]
        %v1070 = vld [vmem:[%s7 + $0x98] sm:$0xff]
        %v1071 = vld [vmem:[%s7 + $0xa0] sm:$0xff]
        %v1072 = vld [vmem:[%s7 + $0xa8] sm:$0xff]
        %v1073 = vld [vmem:[%s7 + $0xb0] sm:$0xff]
        %v1074 = vld [vmem:[%s7 + $0xb8] sm:$0xff]
        %v1075 = vld [vmem:[%s7 + $0xc0] sm:$0xff]
        %v1076 = vrot.slane %v609, 4
        %v1077 = vrot.slane %v610, 4
        %v1078 = vrot.slane %v611, 4
        %v1079 = vrot.slane %v612, 4
        %v1081 = vsel %vm406, %v1051, 0
        %v1084 = vsel %vm406, %v1052, 0
        %v1087 = vsel %vm406, %v1053, 0
        %v1090 = vsel %vm406, %v1054, 0
        %v1093 = vsel %vm406, %v1055, 0
        %v1096 = vsel %vm406, %v1056, 0
        %v1099 = vsel %vm406, %v1057, 0
        %v1102 = vsel %vm406, %v1058, 0
        %v1105 = vsel %vm406, %v1059, 0
        %v1108 = vsel %vm406, %v1060, 0
        %v1111 = vsel %vm406, %v1061, 0
        %v1114 = vsel %vm406, %v1062, 0
        %v1117 = vsel %vm406, %v1063, 0
        %v1120 = vsel %vm406, %v1064, 0
        %v1123 = vsel %vm406, %v1065, 0
        %v1126 = vsel %vm406, %v1066, 0
        %v1129 = vsel %vm406, %v1067, 0
        %v1132 = vsel %vm406, %v1068, 0
        %v1135 = vsel %vm406, %v1069, 0
        %v1138 = vsel %vm406, %v1070, 0
        %v1141 = vsel %vm406, %v1071, 0
        %v1144 = vsel %vm406, %v1072, 0
        %v1147 = vsel %vm406, %v1073, 0
        %v1150 = vsel %vm406, %v1074, 0
        %v1153 = vsel %vm406, %v1075, 0
        %v1155 = vsel %vm413, %v1076, 0
        %v1157 = vsel %vm413, %v1077, 0
        %v1159 = vsel %vm413, %v1078, 0
        %v1161 = vsel %vm413, %v1079, 0
        %1163 = vmatprep.subr.mxu0 0.0
        %1164 = vmatpush1.msra.mxu0 0.0
        %1165 = vmatprep.subr.mxu0 0.0
        %1166 = vmatpush1.msra.mxu0 0.0
        %1167 = vmatprep.subr.mxu0 0.0
        %1168 = vmatpush1.msra.mxu0 0.0
        %1169 = vmatprep.subr.mxu0 0.0
        %1170 = vmatpush1.msra.mxu0 0.0
        %1171 = vmatprep.subr.mxu0 0.0
        %1172 = vmatpush1.msra.mxu0 0.0
        %1173 = vmatprep.subr.mxu0 0.0
        %1174 = vmatpush1.msra.mxu0 0.0
        %1175 = vmatprep.subr.mxu0 0.0
        %1176 = vmatpush1.msra.mxu0 0.0
        %1177 = vmatprep.subr.mxu0 0.0
        %1178 = vmatpush1.msra.mxu0 0.0
        %1179 = vmatprep.subr.mxu0 0.0
        %1180 = vmatpush1.msra.mxu0 0.0
        %1181 = vmatprep.subr.mxu0 0.0
        %1182 = vmatpush1.msra.mxu0 0.0
        %1183 = vmatprep.subr.mxu0 0.0
        %1184 = vmatpush1.msra.mxu0 0.0
        %1185 = vmatprep.subr.mxu0 0.0
        %1186 = vmatpush1.msra.mxu0 0.0
        %1187 = vmatprep.subr.mxu0 0.0
        %1188 = vmatpush1.msra.mxu0 0.0
        %1189 = vmatprep.subr.mxu0 0.0
        %1190 = vmatpush1.msra.mxu0 0.0
        %1191 = vmatprep.subr.mxu0 0.0
        %1192 = vmatpush1.msra.mxu0 0.0
        %1193 = vmatprep.subr.mxu0 %v1157
        %1194 = vmatpush1.msra.mxu0 %v1155
        %1195 = vmatprep.subr.mxu0 0.0
        %1196 = vmatpush2.msra.mxu0 0.0
        %1197 = vmatprep.subr.mxu0 0.0
        %1198 = vmatpush2.msra.mxu0 0.0
        %1199 = vmatprep.subr.mxu0 0.0
        %1200 = vmatpush2.msra.mxu0 0.0
        %1201 = vmatprep.subr.mxu0 0.0
        %1202 = vmatpush2.msra.mxu0 0.0
        %1203 = vmatprep.subr.mxu0 0.0
        %1204 = vmatpush2.msra.mxu0 0.0
        %1205 = vmatprep.subr.mxu0 0.0
        %1206 = vmatpush2.msra.mxu0 0.0
        %1207 = vmatprep.subr.mxu0 0.0
        %1208 = vmatpush2.msra.mxu0 0.0
        %1209 = vmatprep.subr.mxu0 0.0
        %1210 = vmatpush2.msra.mxu0 0.0
        %1211 = vmatprep.subr.mxu0 0.0
        %1212 = vmatpush2.msra.mxu0 0.0
        %1213 = vmatprep.subr.mxu0 0.0
        %1214 = vmatpush2.msra.mxu0 0.0
        %1215 = vmatprep.subr.mxu0 0.0
        %1216 = vmatpush2.msra.mxu0 0.0
        %1217 = vmatprep.subr.mxu0 0.0
        %1218 = vmatpush2.msra.mxu0 0.0
        %1219 = vmatprep.subr.mxu0 0.0
        %1220 = vmatpush2.msra.mxu0 0.0
        %1221 = vmatprep.subr.mxu0 0.0
        %1222 = vmatpush2.msra.mxu0 0.0
        %1223 = vmatprep.subr.mxu0 0.0
        %1224 = vmatpush2.msra.mxu0 0.0
        %1225 = vmatprep.subr.mxu0 0.0
        %1226 = vmatpush2.msra.mxu0 0.0
        %1227 = vmatprep.mubr.f32.mxu0 0.0
        %1228 = vmatmul.mubr.f32.gmra.mxu0 %v1081
        %v1229 = vpop.f32.mrf.mxu0
        %v1230 = vadd.f32 0.0, %v1229
        %v1231 = vpop.f32.mrf.mxu0
        %v1232 = vadd.f32 0.0, %v1231
        %1233 = vmatprep.mubr.f32.mxu0 0.0
        %1234 = vmatmul.mubr.f32.gmra.mxu0 %v1084
        %v1235 = vpop.f32.mrf.mxu0
        %v1236 = vadd.f32 0.0, %v1235
        %v1237 = vpop.f32.mrf.mxu0
        %v1238 = vadd.f32 0.0, %v1237
        %1239 = vmatprep.mubr.f32.mxu0 0.0
        %1240 = vmatmul.mubr.f32.gmra.mxu0 %v1087
        %v1241 = vpop.f32.mrf.mxu0
        %v1242 = vadd.f32 0.0, %v1241
        %v1243 = vpop.f32.mrf.mxu0
        %v1244 = vadd.f32 0.0, %v1243
        %1245 = vmatprep.mubr.f32.mxu0 0.0
        %1246 = vmatmul.mubr.f32.gmra.mxu0 %v1090
        %v1247 = vpop.f32.mrf.mxu0
        %v1248 = vadd.f32 0.0, %v1247
        %v1249 = vpop.f32.mrf.mxu0
        %v1250 = vadd.f32 0.0, %v1249
        %1251 = vmatprep.mubr.f32.mxu0 0.0
        %1252 = vmatmul.mubr.f32.gmra.mxu0 %v1093
        %v1253 = vpop.f32.mrf.mxu0
        %v1254 = vadd.f32 0.0, %v1253
        %v1255 = vpop.f32.mrf.mxu0
        %v1256 = vadd.f32 0.0, %v1255
        %1257 = vmatprep.mubr.f32.mxu0 0.0
        %1258 = vmatmul.mubr.f32.gmra.mxu0 %v1096
        %v1259 = vpop.f32.mrf.mxu0
        %v1260 = vadd.f32 0.0, %v1259
        %v1261 = vpop.f32.mrf.mxu0
        %v1262 = vadd.f32 0.0, %v1261
        %1263 = vmatprep.mubr.f32.mxu0 0.0
        %1264 = vmatmul.mubr.f32.gmra.mxu0 %v1099
        %v1265 = vpop.f32.mrf.mxu0
        %v1266 = vadd.f32 0.0, %v1265
        %v1267 = vpop.f32.mrf.mxu0
        %v1268 = vadd.f32 0.0, %v1267
        %1269 = vmatprep.mubr.f32.mxu0 0.0
        %1270 = vmatmul.mubr.f32.gmra.mxu0 %v1102
        %v1271 = vpop.f32.mrf.mxu0
        %v1272 = vadd.f32 0.0, %v1271
        %v1273 = vpop.f32.mrf.mxu0
        %v1274 = vadd.f32 0.0, %v1273
        %1275 = vmatprep.mubr.f32.mxu0 0.0
        %1276 = vmatmul.mubr.f32.gmra.mxu0 %v1105
        %v1277 = vpop.f32.mrf.mxu0
        %v1278 = vadd.f32 0.0, %v1277
        %v1279 = vpop.f32.mrf.mxu0
        %v1280 = vadd.f32 0.0, %v1279
        %1281 = vmatprep.mubr.f32.mxu0 0.0
        %1282 = vmatmul.mubr.f32.gmra.mxu0 %v1108
        %v1283 = vpop.f32.mrf.mxu0
        %v1284 = vadd.f32 0.0, %v1283
        %v1285 = vpop.f32.mrf.mxu0
        %v1286 = vadd.f32 0.0, %v1285
        %1287 = vmatprep.mubr.f32.mxu0 0.0
        %1288 = vmatmul.mubr.f32.gmra.mxu0 %v1111
        %v1289 = vpop.f32.mrf.mxu0
        %v1290 = vadd.f32 0.0, %v1289
        %v1291 = vpop.f32.mrf.mxu0
        %v1292 = vadd.f32 0.0, %v1291
        %1293 = vmatprep.mubr.f32.mxu0 0.0
        %1294 = vmatmul.mubr.f32.gmra.mxu0 %v1114
        %v1295 = vpop.f32.mrf.mxu0
        %v1296 = vadd.f32 0.0, %v1295
        %v1297 = vpop.f32.mrf.mxu0
        %v1298 = vadd.f32 0.0, %v1297
        %1299 = vmatprep.mubr.f32.mxu0 0.0
        %1300 = vmatmul.mubr.f32.gmra.mxu0 %v1117
        %v1301 = vpop.f32.mrf.mxu0
        %v1302 = vadd.f32 0.0, %v1301
        %v1303 = vpop.f32.mrf.mxu0
        %v1304 = vadd.f32 0.0, %v1303
        %1305 = vmatprep.mubr.f32.mxu0 0.0
        %1306 = vmatmul.mubr.f32.gmra.mxu0 %v1120
        %v1307 = vpop.f32.mrf.mxu0
        %v1308 = vadd.f32 0.0, %v1307
        %v1309 = vpop.f32.mrf.mxu0
        %v1310 = vadd.f32 0.0, %v1309
        %1311 = vmatprep.mubr.f32.mxu0 0.0
        %1312 = vmatmul.mubr.f32.gmra.mxu0 %v1123
        %v1313 = vpop.f32.mrf.mxu0
        %v1314 = vadd.f32 0.0, %v1313
        %v1315 = vpop.f32.mrf.mxu0
        %v1316 = vadd.f32 0.0, %v1315
        %1317 = vmatprep.mubr.f32.mxu0 0.0
        %1318 = vmatmul.mubr.f32.gmra.mxu0 %v1126
        %v1319 = vpop.f32.mrf.mxu0
        %v1320 = vadd.f32 0.0, %v1319
        %v1321 = vpop.f32.mrf.mxu0
        %v1322 = vadd.f32 0.0, %v1321
        %1323 = vmatprep.mubr.f32.mxu0 0.0
        %1324 = vmatmul.mubr.f32.gmra.mxu0 %v1129
        %v1325 = vpop.f32.mrf.mxu0
        %v1326 = vadd.f32 0.0, %v1325
        %v1327 = vpop.f32.mrf.mxu0
        %v1328 = vadd.f32 0.0, %v1327
        %1329 = vmatprep.mubr.f32.mxu0 0.0
        %1330 = vmatmul.mubr.f32.gmra.mxu0 %v1132
        %v1331 = vpop.f32.mrf.mxu0
        %v1332 = vadd.f32 0.0, %v1331
        %v1333 = vpop.f32.mrf.mxu0
        %v1334 = vadd.f32 0.0, %v1333
        %1335 = vmatprep.mubr.f32.mxu0 0.0
        %1336 = vmatmul.mubr.f32.gmra.mxu0 %v1135
        %v1337 = vpop.f32.mrf.mxu0
        %v1338 = vadd.f32 0.0, %v1337
        %v1339 = vpop.f32.mrf.mxu0
        %v1340 = vadd.f32 0.0, %v1339
        %1341 = vmatprep.mubr.f32.mxu0 0.0
        %1342 = vmatmul.mubr.f32.gmra.mxu0 %v1138
        %v1343 = vpop.f32.mrf.mxu0
        %v1344 = vadd.f32 0.0, %v1343
        %v1345 = vpop.f32.mrf.mxu0
        %v1346 = vadd.f32 0.0, %v1345
        %1347 = vmatprep.mubr.f32.mxu0 0.0
        %1348 = vmatmul.mubr.f32.gmra.mxu0 %v1141
        %v1349 = vpop.f32.mrf.mxu0
        %v1350 = vadd.f32 0.0, %v1349
        %v1351 = vpop.f32.mrf.mxu0
        %v1352 = vadd.f32 0.0, %v1351
        %1353 = vmatprep.mubr.f32.mxu0 0.0
        %1354 = vmatmul.mubr.f32.gmra.mxu0 %v1144
        %v1355 = vpop.f32.mrf.mxu0
        %v1356 = vadd.f32 0.0, %v1355
        %v1357 = vpop.f32.mrf.mxu0
        %v1358 = vadd.f32 0.0, %v1357
        %1359 = vmatprep.mubr.f32.mxu0 0.0
        %1360 = vmatmul.mubr.f32.gmra.mxu0 %v1147
        %v1361 = vpop.f32.mrf.mxu0
        %v1362 = vadd.f32 0.0, %v1361
        %v1363 = vpop.f32.mrf.mxu0
        %v1364 = vadd.f32 0.0, %v1363
        %1365 = vmatprep.mubr.f32.mxu0 0.0
        %1366 = vmatmul.mubr.f32.gmra.mxu0 %v1150
        %v1367 = vpop.f32.mrf.mxu0
        %v1368 = vadd.f32 0.0, %v1367
        %v1369 = vpop.f32.mrf.mxu0
        %v1370 = vadd.f32 0.0, %v1369
        %1371 = vmatprep.mubr.f32.mxu0 0.0
        %1372 = vmatmul.mubr.f32.gmra.mxu0 %v1153
        %v1373 = vpop.f32.mrf.mxu0
        %v1374 = vadd.f32 0.0, %v1373
        %v1375 = vpop.f32.mrf.mxu0
        %v1376 = vadd.f32 0.0, %v1375
        %1377 = vdwg.mxu0
        %1378 = vmatprep.subr.mxu0 0.0
        %1379 = vmatpush1.msra.mxu0 0.0
        %1380 = vmatprep.subr.mxu0 0.0
        %1381 = vmatpush1.msra.mxu0 0.0
        %1382 = vmatprep.subr.mxu0 0.0
        %1383 = vmatpush1.msra.mxu0 0.0
        %1384 = vmatprep.subr.mxu0 0.0
        %1385 = vmatpush1.msra.mxu0 0.0
        %1386 = vmatprep.subr.mxu0 0.0
        %1387 = vmatpush1.msra.mxu0 0.0
        %1388 = vmatprep.subr.mxu0 0.0
        %1389 = vmatpush1.msra.mxu0 0.0
        %1390 = vmatprep.subr.mxu0 0.0
        %1391 = vmatpush1.msra.mxu0 0.0
        %1392 = vmatprep.subr.mxu0 0.0
        %1393 = vmatpush1.msra.mxu0 0.0
        %1394 = vmatprep.subr.mxu0 0.0
        %1395 = vmatpush1.msra.mxu0 0.0
        %1396 = vmatprep.subr.mxu0 0.0
        %1397 = vmatpush1.msra.mxu0 0.0
        %1398 = vmatprep.subr.mxu0 0.0
        %1399 = vmatpush1.msra.mxu0 0.0
        %1400 = vmatprep.subr.mxu0 0.0
        %1401 = vmatpush1.msra.mxu0 0.0
        %1402 = vmatprep.subr.mxu0 0.0
        %1403 = vmatpush1.msra.mxu0 0.0
        %1404 = vmatprep.subr.mxu0 0.0
        %1405 = vmatpush1.msra.mxu0 0.0
        %1406 = vmatprep.subr.mxu0 0.0
        %1407 = vmatpush1.msra.mxu0 0.0
        %1408 = vmatprep.subr.mxu0 %v1161
        %1409 = vmatpush1.msra.mxu0 %v1159
        %1410 = vmatprep.subr.mxu0 0.0
        %1411 = vmatpush2.msra.mxu0 0.0
        %1412 = vmatprep.subr.mxu0 0.0
        %1413 = vmatpush2.msra.mxu0 0.0
        %1414 = vmatprep.subr.mxu0 0.0
        %1415 = vmatpush2.msra.mxu0 0.0
        %1416 = vmatprep.subr.mxu0 0.0
        %1417 = vmatpush2.msra.mxu0 0.0
        %1418 = vmatprep.subr.mxu0 0.0
        %1419 = vmatpush2.msra.mxu0 0.0
        %1420 = vmatprep.subr.mxu0 0.0
        %1421 = vmatpush2.msra.mxu0 0.0
        %1422 = vmatprep.subr.mxu0 0.0
        %1423 = vmatpush2.msra.mxu0 0.0
        %1424 = vmatprep.subr.mxu0 0.0
        %1425 = vmatpush2.msra.mxu0 0.0
        %1426 = vmatprep.subr.mxu0 0.0
        %1427 = vmatpush2.msra.mxu0 0.0
        %1428 = vmatprep.subr.mxu0 0.0
        %1429 = vmatpush2.msra.mxu0 0.0
        %1430 = vmatprep.subr.mxu0 0.0
        %1431 = vmatpush2.msra.mxu0 0.0
        %1432 = vmatprep.subr.mxu0 0.0
        %1433 = vmatpush2.msra.mxu0 0.0
        %1434 = vmatprep.subr.mxu0 0.0
        %1435 = vmatpush2.msra.mxu0 0.0
        %1436 = vmatprep.subr.mxu0 0.0
        %1437 = vmatpush2.msra.mxu0 0.0
        %1438 = vmatprep.subr.mxu0 0.0
        %1439 = vmatpush2.msra.mxu0 0.0
        %1440 = vmatprep.subr.mxu0 0.0
        %1441 = vmatpush2.msra.mxu0 0.0
        %1442 = vmatprep.mubr.f32.mxu0 0.0
        %1443 = vmatmul.mubr.f32.gmra.mxu0 %v1081
        %v1444 = vpop.f32.mrf.mxu0
        %v1445 = vadd.f32 0.0, %v1444
        %v1446 = vpop.f32.mrf.mxu0
        %v1447 = vadd.f32 0.0, %v1446
        %1448 = vmatprep.mubr.f32.mxu0 0.0
        %1449 = vmatmul.mubr.f32.gmra.mxu0 %v1084
        %v1450 = vpop.f32.mrf.mxu0
        %v1451 = vadd.f32 0.0, %v1450
        %v1452 = vpop.f32.mrf.mxu0
        %v1453 = vadd.f32 0.0, %v1452
        %1454 = vmatprep.mubr.f32.mxu0 0.0
        %1455 = vmatmul.mubr.f32.gmra.mxu0 %v1087
        %v1456 = vpop.f32.mrf.mxu0
        %v1457 = vadd.f32 0.0, %v1456
        %v1458 = vpop.f32.mrf.mxu0
        %v1459 = vadd.f32 0.0, %v1458
        %1460 = vmatprep.mubr.f32.mxu0 0.0
        %1461 = vmatmul.mubr.f32.gmra.mxu0 %v1090
        %v1462 = vpop.f32.mrf.mxu0
        %v1463 = vadd.f32 0.0, %v1462
        %v1464 = vpop.f32.mrf.mxu0
        %v1465 = vadd.f32 0.0, %v1464
        %1466 = vmatprep.mubr.f32.mxu0 0.0
        %1467 = vmatmul.mubr.f32.gmra.mxu0 %v1093
        %v1468 = vpop.f32.mrf.mxu0
        %v1469 = vadd.f32 0.0, %v1468
        %v1470 = vpop.f32.mrf.mxu0
        %v1471 = vadd.f32 0.0, %v1470
        %1472 = vmatprep.mubr.f32.mxu0 0.0
        %1473 = vmatmul.mubr.f32.gmra.mxu0 %v1096
        %v1474 = vpop.f32.mrf.mxu0
        %v1475 = vadd.f32 0.0, %v1474
        %v1476 = vpop.f32.mrf.mxu0
        %v1477 = vadd.f32 0.0, %v1476
        %1478 = vmatprep.mubr.f32.mxu0 0.0
        %1479 = vmatmul.mubr.f32.gmra.mxu0 %v1099
        %v1480 = vpop.f32.mrf.mxu0
        %v1481 = vadd.f32 0.0, %v1480
        %v1482 = vpop.f32.mrf.mxu0
        %v1483 = vadd.f32 0.0, %v1482
        %1484 = vmatprep.mubr.f32.mxu0 0.0
        %1485 = vmatmul.mubr.f32.gmra.mxu0 %v1102
        %v1486 = vpop.f32.mrf.mxu0
        %v1487 = vadd.f32 0.0, %v1486
        %v1488 = vpop.f32.mrf.mxu0
        %v1489 = vadd.f32 0.0, %v1488
        %1490 = vmatprep.mubr.f32.mxu0 0.0
        %1491 = vmatmul.mubr.f32.gmra.mxu0 %v1105
        %v1492 = vpop.f32.mrf.mxu0
        %v1493 = vadd.f32 0.0, %v1492
        %v1494 = vpop.f32.mrf.mxu0
        %v1495 = vadd.f32 0.0, %v1494
        %1496 = vmatprep.mubr.f32.mxu0 0.0
        %1497 = vmatmul.mubr.f32.gmra.mxu0 %v1108
        %v1498 = vpop.f32.mrf.mxu0
        %v1499 = vadd.f32 0.0, %v1498
        %v1500 = vpop.f32.mrf.mxu0
        %v1501 = vadd.f32 0.0, %v1500
        %1502 = vmatprep.mubr.f32.mxu0 0.0
        %1503 = vmatmul.mubr.f32.gmra.mxu0 %v1111
        %v1504 = vpop.f32.mrf.mxu0
        %v1505 = vadd.f32 0.0, %v1504
        %v1506 = vpop.f32.mrf.mxu0
        %v1507 = vadd.f32 0.0, %v1506
        %1508 = vmatprep.mubr.f32.mxu0 0.0
        %1509 = vmatmul.mubr.f32.gmra.mxu0 %v1114
        %v1510 = vpop.f32.mrf.mxu0
        %v1511 = vadd.f32 0.0, %v1510
        %v1512 = vpop.f32.mrf.mxu0
        %v1513 = vadd.f32 0.0, %v1512
        %1514 = vmatprep.mubr.f32.mxu0 0.0
        %1515 = vmatmul.mubr.f32.gmra.mxu0 %v1117
        %v1516 = vpop.f32.mrf.mxu0
        %v1517 = vadd.f32 0.0, %v1516
        %v1518 = vpop.f32.mrf.mxu0
        %v1519 = vadd.f32 0.0, %v1518
        %1520 = vmatprep.mubr.f32.mxu0 0.0
        %1521 = vmatmul.mubr.f32.gmra.mxu0 %v1120
        %v1522 = vpop.f32.mrf.mxu0
        %v1523 = vadd.f32 0.0, %v1522
        %v1524 = vpop.f32.mrf.mxu0
        %v1525 = vadd.f32 0.0, %v1524
        %1526 = vmatprep.mubr.f32.mxu0 0.0
        %1527 = vmatmul.mubr.f32.gmra.mxu0 %v1123
        %v1528 = vpop.f32.mrf.mxu0
        %v1529 = vadd.f32 0.0, %v1528
        %v1530 = vpop.f32.mrf.mxu0
        %v1531 = vadd.f32 0.0, %v1530
        %1532 = vmatprep.mubr.f32.mxu0 0.0
        %1533 = vmatmul.mubr.f32.gmra.mxu0 %v1126
        %v1534 = vpop.f32.mrf.mxu0
        %v1535 = vadd.f32 0.0, %v1534
        %v1536 = vpop.f32.mrf.mxu0
        %v1537 = vadd.f32 0.0, %v1536
        %1538 = vmatprep.mubr.f32.mxu0 0.0
        %1539 = vmatmul.mubr.f32.gmra.mxu0 %v1129
        %v1540 = vpop.f32.mrf.mxu0
        %v1541 = vadd.f32 0.0, %v1540
        %v1542 = vpop.f32.mrf.mxu0
        %v1543 = vadd.f32 0.0, %v1542
        %1544 = vmatprep.mubr.f32.mxu0 0.0
        %1545 = vmatmul.mubr.f32.gmra.mxu0 %v1132
        %v1546 = vpop.f32.mrf.mxu0
        %v1547 = vadd.f32 0.0, %v1546
        %v1548 = vpop.f32.mrf.mxu0
        %v1549 = vadd.f32 0.0, %v1548
        %1550 = vmatprep.mubr.f32.mxu0 0.0
        %1551 = vmatmul.mubr.f32.gmra.mxu0 %v1135
        %v1552 = vpop.f32.mrf.mxu0
        %v1553 = vadd.f32 0.0, %v1552
        %v1554 = vpop.f32.mrf.mxu0
        %v1555 = vadd.f32 0.0, %v1554
        %1556 = vmatprep.mubr.f32.mxu0 0.0
        %1557 = vmatmul.mubr.f32.gmra.mxu0 %v1138
        %v1558 = vpop.f32.mrf.mxu0
        %v1559 = vadd.f32 0.0, %v1558
        %v1560 = vpop.f32.mrf.mxu0
        %v1561 = vadd.f32 0.0, %v1560
        %1562 = vmatprep.mubr.f32.mxu0 0.0
        %1563 = vmatmul.mubr.f32.gmra.mxu0 %v1141
        %v1564 = vpop.f32.mrf.mxu0
        %v1565 = vadd.f32 0.0, %v1564
        %v1566 = vpop.f32.mrf.mxu0
        %v1567 = vadd.f32 0.0, %v1566
        %1568 = vmatprep.mubr.f32.mxu0 0.0
        %1569 = vmatmul.mubr.f32.gmra.mxu0 %v1144
        %v1570 = vpop.f32.mrf.mxu0
        %v1571 = vadd.f32 0.0, %v1570
        %v1572 = vpop.f32.mrf.mxu0
        %v1573 = vadd.f32 0.0, %v1572
        %1574 = vmatprep.mubr.f32.mxu0 0.0
        %1575 = vmatmul.mubr.f32.gmra.mxu0 %v1147
        %v1576 = vpop.f32.mrf.mxu0
        %v1577 = vadd.f32 0.0, %v1576
        %v1578 = vpop.f32.mrf.mxu0
        %v1579 = vadd.f32 0.0, %v1578
        %1580 = vmatprep.mubr.f32.mxu0 0.0
        %1581 = vmatmul.mubr.f32.gmra.mxu0 %v1150
        %v1582 = vpop.f32.mrf.mxu0
        %v1583 = vadd.f32 0.0, %v1582
        %v1584 = vpop.f32.mrf.mxu0
        %v1585 = vadd.f32 0.0, %v1584
        %1586 = vmatprep.mubr.f32.mxu0 0.0
        %1587 = vmatmul.mubr.f32.gmra.mxu0 %v1153
        %v1588 = vpop.f32.mrf.mxu0
        %v1589 = vadd.f32 0.0, %v1588
        %v1590 = vpop.f32.mrf.mxu0
        %v1591 = vadd.f32 0.0, %v1590
        %1592 = vdwg.mxu0
        %v1593 = vld [vmem:[%s8] sm:$0xff]
        %1594 = vrot.lane.b32.xlu0 %v1230, 42
        %v1595 = vpop.permute.xlu0 %1594
        %1596 = vrot.lane.b32.xlu0 %v1232, 42
        %v1597 = vpop.permute.xlu0 %1596
        %1598 = vrot.lane.b32.xlu0 %v1445, 42
        %v1599 = vpop.permute.xlu0 %1598
        %1600 = vrot.lane.b32.xlu0 %v1447, 42
        %v1601 = vpop.permute.xlu0 %1600
        %vm1602 = vcmp.lt.s32.totalorder %v909, 42
        %v1603 = vsel %vm1602, %v1599, %v1601
        %v1604 = vsel %vm1602, %v1597, %v1599
        %v1605 = vsel %vm1602, %v1595, %v1597
        %v1606 = vsel %vm1602, %v1601, %v1595
        %1608 = vset.pattern.permute.xlu0 0
        %1609 = vperm.xlu0 %1608, %v1593
        %v1610 = vpop.permute.xlu0 %1609
        %v1612 = vadd.f32 %v1610, %v1606
        %v1613 = vadd.f32 %v1610, %v1605
        %v1614 = vadd.f32 %v1610, %v1604
        %v1615 = vadd.f32 %v1610, %v1603
        %1616 = vrot.lane.b32.xlu0 %v1236, 41
        %v1617 = vpop.permute.xlu0 %1616
        %1618 = vrot.lane.b32.xlu0 %v1238, 41
        %v1619 = vpop.permute.xlu0 %1618
        %1620 = vrot.lane.b32.xlu0 %v1451, 41
        %v1621 = vpop.permute.xlu0 %1620
        %1622 = vrot.lane.b32.xlu0 %v1453, 41
        %v1623 = vpop.permute.xlu0 %1622
        %vm1624 = vcmp.lt.s32.totalorder %v909, 41
        %v1625 = vsel %vm1624, %v1621, %v1623
        %v1626 = vsel %vm1624, %v1619, %v1621
        %v1627 = vsel %vm1624, %v1617, %v1619
        %v1628 = vsel %vm1624, %v1623, %v1617
        %v1629 = vadd.f32 %v1612, %v1628
        %v1630 = vadd.f32 %v1613, %v1627
        %v1631 = vadd.f32 %v1614, %v1626
        %v1632 = vadd.f32 %v1615, %v1625
        %1633 = vrot.lane.b32.xlu0 %v1242, 40
        %v1634 = vpop.permute.xlu0 %1633
        %1635 = vrot.lane.b32.xlu0 %v1244, 40
        %v1636 = vpop.permute.xlu0 %1635
        %1637 = vrot.lane.b32.xlu0 %v1457, 40
        %v1638 = vpop.permute.xlu0 %1637
        %1639 = vrot.lane.b32.xlu0 %v1459, 40
        %v1640 = vpop.permute.xlu0 %1639
        %vm1641 = vcmp.lt.s32.totalorder %v909, 40
        %v1642 = vsel %vm1641, %v1638, %v1640
        %v1643 = vsel %vm1641, %v1636, %v1638
        %v1644 = vsel %vm1641, %v1634, %v1636
        %v1645 = vsel %vm1641, %v1640, %v1634
        %v1646 = vadd.f32 %v1629, %v1645
        %v1647 = vadd.f32 %v1630, %v1644
        %v1648 = vadd.f32 %v1631, %v1643
        %v1649 = vadd.f32 %v1632, %v1642
        %1650 = vrot.lane.b32.xlu0 %v1248, 39
        %v1651 = vpop.permute.xlu0 %1650
        %1652 = vrot.lane.b32.xlu0 %v1250, 39
        %v1653 = vpop.permute.xlu0 %1652
        %1654 = vrot.lane.b32.xlu0 %v1463, 39
        %v1655 = vpop.permute.xlu0 %1654
        %1656 = vrot.lane.b32.xlu0 %v1465, 39
        %v1657 = vpop.permute.xlu0 %1656
        %vm1658 = vcmp.lt.s32.totalorder %v909, 39
        %v1659 = vsel %vm1658, %v1655, %v1657
        %v1660 = vsel %vm1658, %v1653, %v1655
        %v1661 = vsel %vm1658, %v1651, %v1653
        %v1662 = vsel %vm1658, %v1657, %v1651
        %v1663 = vadd.f32 %v1646, %v1662
        %v1664 = vadd.f32 %v1647, %v1661
        %v1665 = vadd.f32 %v1648, %v1660
        %v1666 = vadd.f32 %v1649, %v1659
        %1667 = vrot.lane.b32.xlu0 %v1254, 38
        %v1668 = vpop.permute.xlu0 %1667
        %1669 = vrot.lane.b32.xlu0 %v1256, 38
        %v1670 = vpop.permute.xlu0 %1669
        %1671 = vrot.lane.b32.xlu0 %v1469, 38
        %v1672 = vpop.permute.xlu0 %1671
        %1673 = vrot.lane.b32.xlu0 %v1471, 38
        %v1674 = vpop.permute.xlu0 %1673
        %vm1675 = vcmp.lt.s32.totalorder %v909, 38
        %v1676 = vsel %vm1675, %v1672, %v1674
        %v1677 = vsel %vm1675, %v1670, %v1672
        %v1678 = vsel %vm1675, %v1668, %v1670
        %v1679 = vsel %vm1675, %v1674, %v1668
        %v1680 = vadd.f32 %v1663, %v1679
        %v1681 = vadd.f32 %v1664, %v1678
        %v1682 = vadd.f32 %v1665, %v1677
        %v1683 = vadd.f32 %v1666, %v1676
        %1684 = vrot.lane.b32.xlu0 %v1260, 22
        %v1685 = vpop.permute.xlu0 %1684
        %1686 = vrot.lane.b32.xlu0 %v1262, 22
        %v1687 = vpop.permute.xlu0 %1686
        %1688 = vrot.lane.b32.xlu0 %v1475, 22
        %v1689 = vpop.permute.xlu0 %1688
        %1690 = vrot.lane.b32.xlu0 %v1477, 22
        %v1691 = vpop.permute.xlu0 %1690
        %vm1692 = vcmp.lt.s32.totalorder %v909, 22
        %v1693 = vsel %vm1692, %v1689, %v1691
        %v1694 = vsel %vm1692, %v1687, %v1689
        %v1695 = vsel %vm1692, %v1685, %v1687
        %v1696 = vsel %vm1692, %v1691, %v1685
        %v1697 = vadd.f32 %v1680, %v1696
        %v1698 = vadd.f32 %v1681, %v1695
        %v1699 = vadd.f32 %v1682, %v1694
        %v1700 = vadd.f32 %v1683, %v1693
        %1701 = vrot.lane.b32.xlu0 %v1266, 21
        %v1702 = vpop.permute.xlu0 %1701
        %1703 = vrot.lane.b32.xlu0 %v1268, 21
        %v1704 = vpop.permute.xlu0 %1703
        %1705 = vrot.lane.b32.xlu0 %v1481, 21
        %v1706 = vpop.permute.xlu0 %1705
        %1707 = vrot.lane.b32.xlu0 %v1483, 21
        %v1708 = vpop.permute.xlu0 %1707
        %v1709 = vsel %vm910, %v1706, %v1708
        %v1710 = vsel %vm910, %v1704, %v1706
        %v1711 = vsel %vm910, %v1702, %v1704
        %v1712 = vsel %vm910, %v1708, %v1702
        %v1713 = vadd.f32 %v1697, %v1712
        %v1714 = vadd.f32 %v1698, %v1711
        %v1715 = vadd.f32 %v1699, %v1710
        %v1716 = vadd.f32 %v1700, %v1709
        %1717 = vrot.lane.b32.xlu0 %v1272, 20
        %v1718 = vpop.permute.xlu0 %1717
        %1719 = vrot.lane.b32.xlu0 %v1274, 20
        %v1720 = vpop.permute.xlu0 %1719
        %1721 = vrot.lane.b32.xlu0 %v1487, 20
        %v1722 = vpop.permute.xlu0 %1721
        %1723 = vrot.lane.b32.xlu0 %v1489, 20
        %v1724 = vpop.permute.xlu0 %1723
        %v1725 = vsel %vm932, %v1722, %v1724
        %v1726 = vsel %vm932, %v1720, %v1722
        %v1727 = vsel %vm932, %v1718, %v1720
        %v1728 = vsel %vm932, %v1724, %v1718
        %v1729 = vadd.f32 %v1713, %v1728
        %v1730 = vadd.f32 %v1714, %v1727
        %v1731 = vadd.f32 %v1715, %v1726
        %v1732 = vadd.f32 %v1716, %v1725
        %1733 = vrot.lane.b32.xlu0 %v1278, 19
        %v1734 = vpop.permute.xlu0 %1733
        %1735 = vrot.lane.b32.xlu0 %v1280, 19
        %v1736 = vpop.permute.xlu0 %1735
        %1737 = vrot.lane.b32.xlu0 %v1493, 19
        %v1738 = vpop.permute.xlu0 %1737
        %1739 = vrot.lane.b32.xlu0 %v1495, 19
        %v1740 = vpop.permute.xlu0 %1739
        %v1741 = vsel %vm949, %v1738, %v1740
        %v1742 = vsel %vm949, %v1736, %v1738
        %v1743 = vsel %vm949, %v1734, %v1736
        %v1744 = vsel %vm949, %v1740, %v1734
        %v1745 = vadd.f32 %v1729, %v1744
        %v1746 = vadd.f32 %v1730, %v1743
        %v1747 = vadd.f32 %v1731, %v1742
        %v1748 = vadd.f32 %v1732, %v1741
        %1749 = vrot.lane.b32.xlu0 %v1284, 18
        %v1750 = vpop.permute.xlu0 %1749
        %1751 = vrot.lane.b32.xlu0 %v1286, 18
        %v1752 = vpop.permute.xlu0 %1751
        %1753 = vrot.lane.b32.xlu0 %v1499, 18
        %v1754 = vpop.permute.xlu0 %1753
        %1755 = vrot.lane.b32.xlu0 %v1501, 18
        %v1756 = vpop.permute.xlu0 %1755
        %vm1757 = vcmp.lt.s32.totalorder %v909, 18
        %v1758 = vsel %vm1757, %v1754, %v1756
        %v1759 = vsel %vm1757, %v1752, %v1754
        %v1760 = vsel %vm1757, %v1750, %v1752
        %v1761 = vsel %vm1757, %v1756, %v1750
        %v1762 = vadd.f32 %v1745, %v1761
        %v1763 = vadd.f32 %v1746, %v1760
        %v1764 = vadd.f32 %v1747, %v1759
        %v1765 = vadd.f32 %v1748, %v1758
        %1766 = vrot.lane.b32.xlu0 %v1290, 2
        %v1767 = vpop.permute.xlu0 %1766
        %1768 = vrot.lane.b32.xlu0 %v1292, 2
        %v1769 = vpop.permute.xlu0 %1768
        %1770 = vrot.lane.b32.xlu0 %v1505, 2
        %v1771 = vpop.permute.xlu0 %1770
        %1772 = vrot.lane.b32.xlu0 %v1507, 2
        %v1773 = vpop.permute.xlu0 %1772
        %vm1774 = vcmp.lt.s32.totalorder %v909, 2
        %v1775 = vsel %vm1774, %v1771, %v1773
        %v1776 = vsel %vm1774, %v1769, %v1771
        %v1777 = vsel %vm1774, %v1767, %v1769
        %v1778 = vsel %vm1774, %v1773, %v1767
        %v1779 = vadd.f32 %v1762, %v1778
        %v1780 = vadd.f32 %v1763, %v1777
        %v1781 = vadd.f32 %v1764, %v1776
        %v1782 = vadd.f32 %v1765, %v1775
        %1783 = vrot.lane.b32.xlu0 %v1296, 1
        %v1784 = vpop.permute.xlu0 %1783
        %1785 = vrot.lane.b32.xlu0 %v1298, 1
        %v1786 = vpop.permute.xlu0 %1785
        %1787 = vrot.lane.b32.xlu0 %v1511, 1
        %v1788 = vpop.permute.xlu0 %1787
        %1789 = vrot.lane.b32.xlu0 %v1513, 1
        %v1790 = vpop.permute.xlu0 %1789
        %v1791 = vsel %vm966, %v1788, %v1790
        %v1792 = vsel %vm966, %v1786, %v1788
        %v1793 = vsel %vm966, %v1784, %v1786
        %v1794 = vsel %vm966, %v1790, %v1784
        %v1795 = vadd.f32 %v1779, %v1794
        %v1796 = vadd.f32 %v1780, %v1793
        %v1797 = vadd.f32 %v1781, %v1792
        %v1798 = vadd.f32 %v1782, %v1791
        %v1799 = vadd.f32 %v1795, %v1302
        %v1800 = vadd.f32 %v1796, %v1304
        %v1801 = vadd.f32 %v1797, %v1517
        %v1802 = vadd.f32 %v1798, %v1519
        %1803 = vrot.lane.b32.xlu0 %v1308, 127
        %v1804 = vpop.permute.xlu0 %1803
        %1805 = vrot.lane.b32.xlu0 %v1310, 127
        %v1806 = vpop.permute.xlu0 %1805
        %1807 = vrot.lane.b32.xlu0 %v1523, 127
        %v1808 = vpop.permute.xlu0 %1807
        %1809 = vrot.lane.b32.xlu0 %v1525, 127
        %v1810 = vpop.permute.xlu0 %1809
        %v1811 = vsel %vm987, %v1808, %v1810
        %v1812 = vsel %vm987, %v1806, %v1808
        %v1813 = vsel %vm987, %v1804, %v1806
        %v1814 = vsel %vm987, %v1810, %v1804
        %v1815 = vadd.f32 %v1799, %v1813
        %v1816 = vadd.f32 %v1800, %v1812
        %v1817 = vadd.f32 %v1801, %v1811
        %v1818 = vadd.f32 %v1802, %v1814
        %1819 = vrot.lane.b32.xlu0 %v1314, 126
        %v1820 = vpop.permute.xlu0 %1819
        %1821 = vrot.lane.b32.xlu0 %v1316, 126
        %v1822 = vpop.permute.xlu0 %1821
        %1823 = vrot.lane.b32.xlu0 %v1529, 126
        %v1824 = vpop.permute.xlu0 %1823
        %1825 = vrot.lane.b32.xlu0 %v1531, 126
        %v1826 = vpop.permute.xlu0 %1825
        %vm1827 = vcmp.lt.s32.totalorder %v909, 126
        %v1828 = vsel %vm1827, %v1824, %v1826
        %v1829 = vsel %vm1827, %v1822, %v1824
        %v1830 = vsel %vm1827, %v1820, %v1822
        %v1831 = vsel %vm1827, %v1826, %v1820
        %v1832 = vadd.f32 %v1815, %v1830
        %v1833 = vadd.f32 %v1816, %v1829
        %v1834 = vadd.f32 %v1817, %v1828
        %v1835 = vadd.f32 %v1818, %v1831
        %1836 = vrot.lane.b32.xlu0 %v1320, 110
        %v1837 = vpop.permute.xlu0 %1836
        %1838 = vrot.lane.b32.xlu0 %v1322, 110
        %v1839 = vpop.permute.xlu0 %1838
        %1840 = vrot.lane.b32.xlu0 %v1535, 110
        %v1841 = vpop.permute.xlu0 %1840
        %1842 = vrot.lane.b32.xlu0 %v1537, 110
        %v1843 = vpop.permute.xlu0 %1842
        %vm1844 = vcmp.lt.s32.totalorder %v909, 110
        %v1845 = vsel %vm1844, %v1841, %v1843
        %v1846 = vsel %vm1844, %v1839, %v1841
        %v1847 = vsel %vm1844, %v1837, %v1839
        %v1848 = vsel %vm1844, %v1843, %v1837
        %v1849 = vadd.f32 %v1832, %v1847
        %v1850 = vadd.f32 %v1833, %v1846
        %v1851 = vadd.f32 %v1834, %v1845
        %v1852 = vadd.f32 %v1835, %v1848
        %1853 = vrot.lane.b32.xlu0 %v1326, 109
        %v1854 = vpop.permute.xlu0 %1853
        %1855 = vrot.lane.b32.xlu0 %v1328, 109
        %v1856 = vpop.permute.xlu0 %1855
        %1857 = vrot.lane.b32.xlu0 %v1541, 109
        %v1858 = vpop.permute.xlu0 %1857
        %1859 = vrot.lane.b32.xlu0 %v1543, 109
        %v1860 = vpop.permute.xlu0 %1859
        %v1861 = vsel %vm1004, %v1858, %v1860
        %v1862 = vsel %vm1004, %v1856, %v1858
        %v1863 = vsel %vm1004, %v1854, %v1856
        %v1864 = vsel %vm1004, %v1860, %v1854
        %v1865 = vadd.f32 %v1849, %v1863
        %v1866 = vadd.f32 %v1850, %v1862
        %v1867 = vadd.f32 %v1851, %v1861
        %v1868 = vadd.f32 %v1852, %v1864
        %1869 = vrot.lane.b32.xlu0 %v1332, 108
        %v1870 = vpop.permute.xlu0 %1869
        %1871 = vrot.lane.b32.xlu0 %v1334, 108
        %v1872 = vpop.permute.xlu0 %1871
        %1873 = vrot.lane.b32.xlu0 %v1547, 108
        %v1874 = vpop.permute.xlu0 %1873
        %1875 = vrot.lane.b32.xlu0 %v1549, 108
        %v1876 = vpop.permute.xlu0 %1875
        %v1877 = vsel %vm1021, %v1874, %v1876
        %v1878 = vsel %vm1021, %v1872, %v1874
        %v1879 = vsel %vm1021, %v1870, %v1872
        %v1880 = vsel %vm1021, %v1876, %v1870
        %v1881 = vadd.f32 %v1865, %v1879
        %v1882 = vadd.f32 %v1866, %v1878
        %v1883 = vadd.f32 %v1867, %v1877
        %v1884 = vadd.f32 %v1868, %v1880
        %1885 = vrot.lane.b32.xlu0 %v1338, 107
        %v1886 = vpop.permute.xlu0 %1885
        %1887 = vrot.lane.b32.xlu0 %v1340, 107
        %v1888 = vpop.permute.xlu0 %1887
        %1889 = vrot.lane.b32.xlu0 %v1553, 107
        %v1890 = vpop.permute.xlu0 %1889
        %1891 = vrot.lane.b32.xlu0 %v1555, 107
        %v1892 = vpop.permute.xlu0 %1891
        %v1893 = vsel %vm1038, %v1890, %v1892
        %v1894 = vsel %vm1038, %v1888, %v1890
        %v1895 = vsel %vm1038, %v1886, %v1888
        %v1896 = vsel %vm1038, %v1892, %v1886
        %v1897 = vadd.f32 %v1881, %v1895
        %v1898 = vadd.f32 %v1882, %v1894
        %v1899 = vadd.f32 %v1883, %v1893
        %v1900 = vadd.f32 %v1884, %v1896
        %1901 = vrot.lane.b32.xlu0 %v1344, 106
        %v1902 = vpop.permute.xlu0 %1901
        %1903 = vrot.lane.b32.xlu0 %v1346, 106
        %v1904 = vpop.permute.xlu0 %1903
        %1905 = vrot.lane.b32.xlu0 %v1559, 106
        %v1906 = vpop.permute.xlu0 %1905
        %1907 = vrot.lane.b32.xlu0 %v1561, 106
        %v1908 = vpop.permute.xlu0 %1907
        %vm1909 = vcmp.lt.s32.totalorder %v909, 106
        %v1910 = vsel %vm1909, %v1906, %v1908
        %v1911 = vsel %vm1909, %v1904, %v1906
        %v1912 = vsel %vm1909, %v1902, %v1904
        %v1913 = vsel %vm1909, %v1908, %v1902
        %v1914 = vadd.f32 %v1897, %v1912
        %v1915 = vadd.f32 %v1898, %v1911
        %v1916 = vadd.f32 %v1899, %v1910
        %v1917 = vadd.f32 %v1900, %v1913
        %1918 = vrot.lane.b32.xlu0 %v1350, 90
        %v1919 = vpop.permute.xlu0 %1918
        %1920 = vrot.lane.b32.xlu0 %v1352, 90
        %v1921 = vpop.permute.xlu0 %1920
        %1922 = vrot.lane.b32.xlu0 %v1565, 90
        %v1923 = vpop.permute.xlu0 %1922
        %1924 = vrot.lane.b32.xlu0 %v1567, 90
        %v1925 = vpop.permute.xlu0 %1924
        %vm1926 = vcmp.lt.s32.totalorder %v909, 90
        %v1927 = vsel %vm1926, %v1923, %v1925
        %v1928 = vsel %vm1926, %v1921, %v1923
        %v1929 = vsel %vm1926, %v1919, %v1921
        %v1930 = vsel %vm1926, %v1925, %v1919
        %v1931 = vadd.f32 %v1914, %v1929
        %v1932 = vadd.f32 %v1915, %v1928
        %v1933 = vadd.f32 %v1916, %v1927
        %v1934 = vadd.f32 %v1917, %v1930
        %1935 = vrot.lane.b32.xlu0 %v1356, 89
        %v1936 = vpop.permute.xlu0 %1935
        %1937 = vrot.lane.b32.xlu0 %v1358, 89
        %v1938 = vpop.permute.xlu0 %1937
        %1939 = vrot.lane.b32.xlu0 %v1571, 89
        %v1940 = vpop.permute.xlu0 %1939
        %1941 = vrot.lane.b32.xlu0 %v1573, 89
        %v1942 = vpop.permute.xlu0 %1941
        %vm1943 = vcmp.lt.s32.totalorder %v909, 89
        %v1944 = vsel %vm1943, %v1940, %v1942
        %v1945 = vsel %vm1943, %v1938, %v1940
        %v1946 = vsel %vm1943, %v1936, %v1938
        %v1947 = vsel %vm1943, %v1942, %v1936
        %v1948 = vadd.f32 %v1931, %v1946
        %v1949 = vadd.f32 %v1932, %v1945
        %v1950 = vadd.f32 %v1933, %v1944
        %v1951 = vadd.f32 %v1934, %v1947
        %1952 = vrot.lane.b32.xlu0 %v1362, 88
        %v1953 = vpop.permute.xlu0 %1952
        %1954 = vrot.lane.b32.xlu0 %v1364, 88
        %v1955 = vpop.permute.xlu0 %1954
        %1956 = vrot.lane.b32.xlu0 %v1577, 88
        %v1957 = vpop.permute.xlu0 %1956
        %1958 = vrot.lane.b32.xlu0 %v1579, 88
        %v1959 = vpop.permute.xlu0 %1958
        %vm1960 = vcmp.lt.s32.totalorder %v909, 88
        %v1961 = vsel %vm1960, %v1957, %v1959
        %v1962 = vsel %vm1960, %v1955, %v1957
        %v1963 = vsel %vm1960, %v1953, %v1955
        %v1964 = vsel %vm1960, %v1959, %v1953
        %v1965 = vadd.f32 %v1948, %v1963
        %v1966 = vadd.f32 %v1949, %v1962
        %v1967 = vadd.f32 %v1950, %v1961
        %v1968 = vadd.f32 %v1951, %v1964
        %1969 = vrot.lane.b32.xlu0 %v1368, 87
        %v1970 = vpop.permute.xlu0 %1969
        %1971 = vrot.lane.b32.xlu0 %v1370, 87
        %v1972 = vpop.permute.xlu0 %1971
        %1973 = vrot.lane.b32.xlu0 %v1583, 87
        %v1974 = vpop.permute.xlu0 %1973
        %1975 = vrot.lane.b32.xlu0 %v1585, 87
        %v1976 = vpop.permute.xlu0 %1975
        %vm1977 = vcmp.lt.s32.totalorder %v909, 87
        %v1978 = vsel %vm1977, %v1974, %v1976
        %v1979 = vsel %vm1977, %v1972, %v1974
        %v1980 = vsel %vm1977, %v1970, %v1972
        %v1981 = vsel %vm1977, %v1976, %v1970
        %v1982 = vadd.f32 %v1965, %v1980
        %v1983 = vadd.f32 %v1966, %v1979
        %v1984 = vadd.f32 %v1967, %v1978
        %v1985 = vadd.f32 %v1968, %v1981
        %1986 = vrot.lane.b32.xlu0 %v1374, 86
        %v1987 = vpop.permute.xlu0 %1986
        %1988 = vrot.lane.b32.xlu0 %v1376, 86
        %v1989 = vpop.permute.xlu0 %1988
        %1990 = vrot.lane.b32.xlu0 %v1589, 86
        %v1991 = vpop.permute.xlu0 %1990
        %1992 = vrot.lane.b32.xlu0 %v1591, 86
        %v1993 = vpop.permute.xlu0 %1992
        %vm1994 = vcmp.lt.s32.totalorder %v909, 86
        %v1995 = vsel %vm1994, %v1991, %v1993
        %v1996 = vsel %vm1994, %v1989, %v1991
        %v1997 = vsel %vm1994, %v1987, %v1989
        %v1998 = vsel %vm1994, %v1993, %v1987
        %v1999 = vadd.f32 %v1982, %v1997
        %v2000 = vadd.f32 %v1983, %v1996
        %v2001 = vadd.f32 %v1984, %v1995
        %v2002 = vadd.f32 %v1985, %v1998
        %v2003 = vmax.f32 %v1999, 0.0
        %v2004 = vmax.f32 %v2000, 0.0
        %v2005 = vmax.f32 %v2001, 0.0
        %v2006 = vmax.f32 %v2002, 0.0
        %v2007 = vld [vmem:[%s2] sm:$0xf]
        %v2009 = vlaneseq
        %v2010 = vshrl.u32 %v2009, 7
        %v2011 = vsub.s32 0, %v2010
        %v2012 = vrot.slane %v2007, %v2011
        %v2013 = vlaneseq
        %v2014 = vshrl.u32 %v2013, 7
        %v2015 = vsub.s32 1, %v2014
        %v2016 = vrot.slane %v2007, %v2015
        %v2017 = vlaneseq
        %v2018 = vshrl.u32 %v2017, 7
        %v2019 = vsub.s32 2, %v2018
        %v2020 = vrot.slane %v2007, %v2019
        %v2021 = vlaneseq
        %v2022 = vshrl.u32 %v2021, 7
        %v2023 = vsub.s32 3, %v2022
        %v2024 = vrot.slane %v2007, %v2023
        %v2025 = vcombine.low %v2012, %v2016
        %v2026 = vcombine.low %v2020, %v2024
        %v2029 = vadd.f32 %v385, %v2025
        %v2030 = vadd.f32 %v386, %v2026
        %v2033 = vcombine.high %v2029, %v2029
        %v2034 = vcombine.high %v2030, %v2030
        %2037 = vrot.lane.b32.xlu0 %v2029, 21
        %v2038 = vpop.permute.xlu0 %2037
        %2039 = vrot.lane.b32.xlu0 %v2033, 21
        %v2040 = vpop.permute.xlu0 %2039
        %2041 = vrot.lane.b32.xlu0 %v2030, 21
        %v2042 = vpop.permute.xlu0 %2041
        %2043 = vrot.lane.b32.xlu0 %v2034, 21
        %v2044 = vpop.permute.xlu0 %2043
        %v2045 = vsel %vm910, %v2042, %v2044
        %v2046 = vsel %vm910, %v2040, %v2042
        %v2047 = vsel %vm910, %v2038, %v2040
        %v2048 = vsel %vm910, %v2044, %v2038
        %v2053 = vcombine.low %v2048, %v2047
        %v2054 = vcombine.low %v2046, %v2045
        %v2057 = vmax.f32 %v2029, %v2053
        %v2058 = vmax.f32 %v2030, %v2054
        %2059 = vrot.lane.b32.xlu0 %v2029, 20
        %v2060 = vpop.permute.xlu0 %2059
        %2061 = vrot.lane.b32.xlu0 %v2033, 20
        %v2062 = vpop.permute.xlu0 %2061
        %2063 = vrot.lane.b32.xlu0 %v2030, 20
        %v2064 = vpop.permute.xlu0 %2063
        %2065 = vrot.lane.b32.xlu0 %v2034, 20
        %v2066 = vpop.permute.xlu0 %2065
        %v2067 = vsel %vm932, %v2064, %v2066
        %v2068 = vsel %vm932, %v2062, %v2064
        %v2069 = vsel %vm932, %v2060, %v2062
        %v2070 = vsel %vm932, %v2066, %v2060
        %v2075 = vcombine.low %v2070, %v2069
        %v2076 = vcombine.low %v2068, %v2067
        %v2079 = vmax.f32 %v2057, %v2075
        %v2080 = vmax.f32 %v2058, %v2076
        %2081 = vrot.lane.b32.xlu0 %v2029, 19
        %v2082 = vpop.permute.xlu0 %2081
        %2083 = vrot.lane.b32.xlu0 %v2033, 19
        %v2084 = vpop.permute.xlu0 %2083
        %2085 = vrot.lane.b32.xlu0 %v2030, 19
        %v2086 = vpop.permute.xlu0 %2085
        %2087 = vrot.lane.b32.xlu0 %v2034, 19
        %v2088 = vpop.permute.xlu0 %2087
        %v2089 = vsel %vm949, %v2086, %v2088
        %v2090 = vsel %vm949, %v2084, %v2086
        %v2091 = vsel %vm949, %v2082, %v2084
        %v2092 = vsel %vm949, %v2088, %v2082
        %v2097 = vcombine.low %v2092, %v2091
        %v2098 = vcombine.low %v2090, %v2089
        %v2101 = vmax.f32 %v2079, %v2097
        %v2102 = vmax.f32 %v2080, %v2098
        %2103 = vrot.lane.b32.xlu0 %v2029, 1
        %v2104 = vpop.permute.xlu0 %2103
        %2105 = vrot.lane.b32.xlu0 %v2033, 1
        %v2106 = vpop.permute.xlu0 %2105
        %2107 = vrot.lane.b32.xlu0 %v2030, 1
        %v2108 = vpop.permute.xlu0 %2107
        %2109 = vrot.lane.b32.xlu0 %v2034, 1
        %v2110 = vpop.permute.xlu0 %2109
        %v2111 = vsel %vm966, %v2108, %v2110
        %v2112 = vsel %vm966, %v2106, %v2108
        %v2113 = vsel %vm966, %v2104, %v2106
        %v2114 = vsel %vm966, %v2110, %v2104
        %v2119 = vcombine.low %v2114, %v2113
        %v2120 = vcombine.low %v2112, %v2111
        %v2123 = vmax.f32 %v2101, %v2119
        %v2124 = vmax.f32 %v2102, %v2120
        %2125 = vrot.lane.b32.xlu0 %v2029, 127
        %v2126 = vpop.permute.xlu0 %2125
        %2127 = vrot.lane.b32.xlu0 %v2033, 127
        %v2128 = vpop.permute.xlu0 %2127
        %2129 = vrot.lane.b32.xlu0 %v2030, 127
        %v2130 = vpop.permute.xlu0 %2129
        %2131 = vrot.lane.b32.xlu0 %v2034, 127
        %v2132 = vpop.permute.xlu0 %2131
        %v2133 = vsel %vm987, %v2130, %v2132
        %v2134 = vsel %vm987, %v2128, %v2130
        %v2135 = vsel %vm987, %v2126, %v2128
        %v2136 = vsel %vm987, %v2132, %v2126
        %v2141 = vcombine.low %v2135, %v2134
        %v2142 = vcombine.low %v2133, %v2136
        %v2145 = vmax.f32 %v2123, %v2141
        %v2146 = vmax.f32 %v2124, %v2142
        %2147 = vrot.lane.b32.xlu0 %v2029, 109
        %v2148 = vpop.permute.xlu0 %2147
        %2149 = vrot.lane.b32.xlu0 %v2033, 109
        %v2150 = vpop.permute.xlu0 %2149
        %2151 = vrot.lane.b32.xlu0 %v2030, 109
        %v2152 = vpop.permute.xlu0 %2151
        %2153 = vrot.lane.b32.xlu0 %v2034, 109
        %v2154 = vpop.permute.xlu0 %2153
        %v2155 = vsel %vm1004, %v2152, %v2154
        %v2156 = vsel %vm1004, %v2150, %v2152
        %v2157 = vsel %vm1004, %v2148, %v2150
        %v2158 = vsel %vm1004, %v2154, %v2148
        %v2163 = vcombine.low %v2157, %v2156
        %v2164 = vcombine.low %v2155, %v2158
        %v2167 = vmax.f32 %v2145, %v2163
        %v2168 = vmax.f32 %v2146, %v2164
        %2169 = vrot.lane.b32.xlu0 %v2029, 108
        %v2170 = vpop.permute.xlu0 %2169
        %2171 = vrot.lane.b32.xlu0 %v2033, 108
        %v2172 = vpop.permute.xlu0 %2171
        %2173 = vrot.lane.b32.xlu0 %v2030, 108
        %v2174 = vpop.permute.xlu0 %2173
        %2175 = vrot.lane.b32.xlu0 %v2034, 108
        %v2176 = vpop.permute.xlu0 %2175
        %v2177 = vsel %vm1021, %v2174, %v2176
        %v2178 = vsel %vm1021, %v2172, %v2174
        %v2179 = vsel %vm1021, %v2170, %v2172
        %v2180 = vsel %vm1021, %v2176, %v2170
        %v2185 = vcombine.low %v2179, %v2178
        %v2186 = vcombine.low %v2177, %v2180
        %v2189 = vmax.f32 %v2167, %v2185
        %v2190 = vmax.f32 %v2168, %v2186
        %2191 = vrot.lane.b32.xlu0 %v2029, 107
        %v2192 = vpop.permute.xlu0 %2191
        %2193 = vrot.lane.b32.xlu0 %v2033, 107
        %v2194 = vpop.permute.xlu0 %2193
        %2195 = vrot.lane.b32.xlu0 %v2030, 107
        %v2196 = vpop.permute.xlu0 %2195
        %2197 = vrot.lane.b32.xlu0 %v2034, 107
        %v2198 = vpop.permute.xlu0 %2197
        %v2199 = vsel %vm1038, %v2196, %v2198
        %v2200 = vsel %vm1038, %v2194, %v2196
        %v2201 = vsel %vm1038, %v2192, %v2194
        %v2202 = vsel %vm1038, %v2198, %v2192
        %v2207 = vcombine.low %v2201, %v2200
        %v2208 = vcombine.low %v2199, %v2202
        %v2211 = vmax.f32 %v2189, %v2207
        %v2212 = vmax.f32 %v2190, %v2208
        %v2213 = vld [vmem:[%s9] sm:$0xff]
        %v2214 = vld [vmem:[%s10] sm:$0xff]
        %2216 = vset.pattern.permute.xlu0 0
        %2217 = vperm.xlu0 %2216, %v2214
        %v2218 = vpop.permute.xlu0 %2217
        %v2222 = vcombine.high %v2211, %v2211
        %v2223 = vcombine.high %v2212, %v2212
        %v2225 = vsel %vm406, %v2213, 0
        %v2227 = vsel %vm413, %v2211, 0
        %v2229 = vsel %vm413, %v2222, 0
        %v2231 = vsel %vm413, %v2212, 0
        %v2233 = vsel %vm413, %v2223, 0
        %2235 = vmatprep.subr.mxu0 0.0
        %2236 = vmatpush1.msra.mxu0 0.0
        %2237 = vmatprep.subr.mxu0 0.0
        %2238 = vmatpush1.msra.mxu0 0.0
        %2239 = vmatprep.subr.mxu0 0.0
        %2240 = vmatpush1.msra.mxu0 0.0
        %2241 = vmatprep.subr.mxu0 0.0
        %2242 = vmatpush1.msra.mxu0 0.0
        %2243 = vmatprep.subr.mxu0 0.0
        %2244 = vmatpush1.msra.mxu0 0.0
        %2245 = vmatprep.subr.mxu0 0.0
        %2246 = vmatpush1.msra.mxu0 0.0
        %2247 = vmatprep.subr.mxu0 0.0
        %2248 = vmatpush1.msra.mxu0 0.0
        %2249 = vmatprep.subr.mxu0 0.0
        %2250 = vmatpush1.msra.mxu0 0.0
        %2251 = vmatprep.subr.mxu0 0.0
        %2252 = vmatpush1.msra.mxu0 0.0
        %2253 = vmatprep.subr.mxu0 0.0
        %2254 = vmatpush1.msra.mxu0 0.0
        %2255 = vmatprep.subr.mxu0 0.0
        %2256 = vmatpush1.msra.mxu0 0.0
        %2257 = vmatprep.subr.mxu0 0.0
        %2258 = vmatpush1.msra.mxu0 0.0
        %2259 = vmatprep.subr.mxu0 0.0
        %2260 = vmatpush1.msra.mxu0 0.0
        %2261 = vmatprep.subr.mxu0 0.0
        %2262 = vmatpush1.msra.mxu0 0.0
        %2263 = vmatprep.subr.mxu0 0.0
        %2264 = vmatpush1.msra.mxu0 0.0
        %2265 = vmatprep.subr.mxu0 %v2229
        %2266 = vmatpush1.msra.mxu0 %v2227
        %2267 = vmatprep.subr.mxu0 0.0
        %2268 = vmatpush2.msra.mxu0 0.0
        %2269 = vmatprep.subr.mxu0 0.0
        %2270 = vmatpush2.msra.mxu0 0.0
        %2271 = vmatprep.subr.mxu0 0.0
        %2272 = vmatpush2.msra.mxu0 0.0
        %2273 = vmatprep.subr.mxu0 0.0
        %2274 = vmatpush2.msra.mxu0 0.0
        %2275 = vmatprep.subr.mxu0 0.0
        %2276 = vmatpush2.msra.mxu0 0.0
        %2277 = vmatprep.subr.mxu0 0.0
        %2278 = vmatpush2.msra.mxu0 0.0
        %2279 = vmatprep.subr.mxu0 0.0
        %2280 = vmatpush2.msra.mxu0 0.0
        %2281 = vmatprep.subr.mxu0 0.0
        %2282 = vmatpush2.msra.mxu0 0.0
        %2283 = vmatprep.subr.mxu0 0.0
        %2284 = vmatpush2.msra.mxu0 0.0
        %2285 = vmatprep.subr.mxu0 0.0
        %2286 = vmatpush2.msra.mxu0 0.0
        %2287 = vmatprep.subr.mxu0 0.0
        %2288 = vmatpush2.msra.mxu0 0.0
        %2289 = vmatprep.subr.mxu0 0.0
        %2290 = vmatpush2.msra.mxu0 0.0
        %2291 = vmatprep.subr.mxu0 0.0
        %2292 = vmatpush2.msra.mxu0 0.0
        %2293 = vmatprep.subr.mxu0 0.0
        %2294 = vmatpush2.msra.mxu0 0.0
        %2295 = vmatprep.subr.mxu0 0.0
        %2296 = vmatpush2.msra.mxu0 0.0
        %2297 = vmatprep.subr.mxu0 0.0
        %2298 = vmatpush2.msra.mxu0 0.0
        %2299 = vmatprep.mubr.f32.mxu0 0.0
        %2300 = vmatmul.mubr.f32.gmra.mxu0 %v2225
        %v2301 = vpop.f32.mrf.mxu0
        %v2302 = vadd.f32 %v2218, %v2301
        %v2303 = vpop.f32.mrf.mxu0
        %v2304 = vadd.f32 %v2218, %v2303
        %2305 = vdwg.mxu0
        %2306 = vmatprep.subr.mxu0 0.0
        %2307 = vmatpush1.msra.mxu0 0.0
        %2308 = vmatprep.subr.mxu0 0.0
        %2309 = vmatpush1.msra.mxu0 0.0
        %2310 = vmatprep.subr.mxu0 0.0
        %2311 = vmatpush1.msra.mxu0 0.0
        %2312 = vmatprep.subr.mxu0 0.0
        %2313 = vmatpush1.msra.mxu0 0.0
        %2314 = vmatprep.subr.mxu0 0.0
        %2315 = vmatpush1.msra.mxu0 0.0
        %2316 = vmatprep.subr.mxu0 0.0
        %2317 = vmatpush1.msra.mxu0 0.0
        %2318 = vmatprep.subr.mxu0 0.0
        %2319 = vmatpush1.msra.mxu0 0.0
        %2320 = vmatprep.subr.mxu0 0.0
        %2321 = vmatpush1.msra.mxu0 0.0
        %2322 = vmatprep.subr.mxu0 0.0
        %2323 = vmatpush1.msra.mxu0 0.0
        %2324 = vmatprep.subr.mxu0 0.0
        %2325 = vmatpush1.msra.mxu0 0.0
        %2326 = vmatprep.subr.mxu0 0.0
        %2327 = vmatpush1.msra.mxu0 0.0
        %2328 = vmatprep.subr.mxu0 0.0
        %2329 = vmatpush1.msra.mxu0 0.0
        %2330 = vmatprep.subr.mxu0 0.0
        %2331 = vmatpush1.msra.mxu0 0.0
        %2332 = vmatprep.subr.mxu0 0.0
        %2333 = vmatpush1.msra.mxu0 0.0
        %2334 = vmatprep.subr.mxu0 0.0
        %2335 = vmatpush1.msra.mxu0 0.0
        %2336 = vmatprep.subr.mxu0 %v2233
        %2337 = vmatpush1.msra.mxu0 %v2231
        %2338 = vmatprep.subr.mxu0 0.0
        %2339 = vmatpush2.msra.mxu0 0.0
        %2340 = vmatprep.subr.mxu0 0.0
        %2341 = vmatpush2.msra.mxu0 0.0
        %2342 = vmatprep.subr.mxu0 0.0
        %2343 = vmatpush2.msra.mxu0 0.0
        %2344 = vmatprep.subr.mxu0 0.0
        %2345 = vmatpush2.msra.mxu0 0.0
        %2346 = vmatprep.subr.mxu0 0.0
        %2347 = vmatpush2.msra.mxu0 0.0
        %2348 = vmatprep.subr.mxu0 0.0
        %2349 = vmatpush2.msra.mxu0 0.0
        %2350 = vmatprep.subr.mxu0 0.0
        %2351 = vmatpush2.msra.mxu0 0.0
        %2352 = vmatprep.subr.mxu0 0.0
        %2353 = vmatpush2.msra.mxu0 0.0
        %2354 = vmatprep.subr.mxu0 0.0
        %2355 = vmatpush2.msra.mxu0 0.0
        %2356 = vmatprep.subr.mxu0 0.0
        %2357 = vmatpush2.msra.mxu0 0.0
        %2358 = vmatprep.subr.mxu0 0.0
        %2359 = vmatpush2.msra.mxu0 0.0
        %2360 = vmatprep.subr.mxu0 0.0
        %2361 = vmatpush2.msra.mxu0 0.0
        %2362 = vmatprep.subr.mxu0 0.0
        %2363 = vmatpush2.msra.mxu0 0.0
        %2364 = vmatprep.subr.mxu0 0.0
        %2365 = vmatpush2.msra.mxu0 0.0
        %2366 = vmatprep.subr.mxu0 0.0
        %2367 = vmatpush2.msra.mxu0 0.0
        %2368 = vmatprep.subr.mxu0 0.0
        %2369 = vmatpush2.msra.mxu0 0.0
        %2370 = vmatprep.mubr.f32.mxu0 0.0
        %2371 = vmatmul.mubr.f32.gmra.mxu0 %v2225
        %v2372 = vpop.f32.mrf.mxu0
        %v2373 = vadd.f32 %v2218, %v2372
        %v2374 = vpop.f32.mrf.mxu0
        %v2375 = vadd.f32 %v2218, %v2374
        %2376 = vdwg.mxu0
        %v2377 = vmax.f32 %v2302, 0.0
        %v2378 = vmax.f32 %v2304, 0.0
        %v2379 = vmax.f32 %v2373, 0.0
        %v2380 = vmax.f32 %v2375, 0.0
        %2381 = vst [vmem:[%s379] sm:$0xff] %v605
        %2382 = vst [vmem:[%s379 + $0x8] sm:$0xff] %v606
        %2383 = vst [vmem:[%s379 + $0x10] sm:$0xff] %v607
        %2384 = vst [vmem:[%s379 + $0x18] sm:$0xff] %v608
        %2385 = vst [vmem:[%s379 + $0x20] sm:$0xff] %v1047
        %2386 = vst [vmem:[%s379 + $0x28] sm:$0xff] %v1048
        %2387 = vst [vmem:[%s379 + $0x30] sm:$0xff] %v1049
        %2388 = vst [vmem:[%s379 + $0x38] sm:$0xff] %v1050
        %2389 = vst [vmem:[%s379 + $0x40] sm:$0xff] %v2003
        %2390 = vst [vmem:[%s379 + $0x48] sm:$0xff] %v2004
        %2391 = vst [vmem:[%s379 + $0x50] sm:$0xff] %v2005
        %2392 = vst [vmem:[%s379 + $0x58] sm:$0xff] %v2006
        %2393 = vst [vmem:[%s379 + $0x60] sm:$0xff] %v2377
        %2394 = vst [vmem:[%s379 + $0x68] sm:$0xff] %v2378
        %2395 = vst [vmem:[%s379 + $0x70] sm:$0xff] %v2379
        %2396 = vst [vmem:[%s379 + $0x78] sm:$0xff] %v2380
        %s2397 = sand.u32 %s269, 1
        %s2398 = scalar_lea.sflag [#allocation3], %s2397
        %s2399 = sand.u32 %s269, 1
        %s2400 = smul.addr %s2399, 128
        %s2401 = scalar_lea.vmem [#allocation2], %s2400
        // Predicated region
        $region65: #{tpu_custom_call.1} parent=63 // pred_check
          %p2402 = pneg %p279
        $region66: #{tpu_custom_call.1} parent=63 // pred_check_branch
          %2404 = sbr.rel (%p2402) target = $region68
        $region67: #{tpu_custom_call.1} parent=63 // pred_region
          %s2406 = ssub.s32 2048, 2048
          %2407 = vsyncadd %s2398, %s2406
          %s2408 = smul.addr %s25, 16
          %s2409 = smul.addr %s2408, 128
          %s2410 = scalar_lea.hbm %s11, %s2409
          %s2411 = sshll.u32 %s2401, 4
          %s2412 = int_to_ptr.vmem [resolvable:$true] %s2411
          %2417 = dma.vmem_to_hbm [thread:$0]  %s2412, 2048, %s2410, %s2398, 512, 512, 32
        $region68: #{tpu_custom_call.1} parent=63 // pred_fallthru
          _
      $region64: #{tpu_custom_call.1} parent=5 // pred_fallthru
        _
      %p2418 = scmp.le.s32.totalorder 2, %s20
      // Predicated region
      $region69: #{tpu_custom_call.1} parent=5 // pred_check
        %p2419 = pneg %p2418
      $region70: #{tpu_custom_call.1} parent=5 // pred_check_branch
        %2421 = sbr.rel (%p2419) target = $region72
      $region71: #{tpu_custom_call.1} parent=5 // pred_region
        %s2422 = ssub.s32 %s20, 2
        // Predicated region
        $region73: #{tpu_custom_call.1} parent=71 // pred_check
          %p2423 = pneg %p285
        $region74: #{tpu_custom_call.1} parent=71 // pred_check_branch
          %2425 = sbr.rel (%p2423) target = $region76
        $region75: #{tpu_custom_call.1} parent=71 // pred_region
          %s2426 = sand.u32 %s270, 1
          %s2427 = scalar_lea.sflag [#allocation3], %s2426
          %s2428 = sand.u32 %s270, 1
          %s2429 = smul.addr %s2428, 128
          %s2430 = scalar_lea.vmem [#allocation2], %s2429
          %2431 = dma.done %s2427, 2048
        $region76: #{tpu_custom_call.1} parent=71 // pred_fallthru
          _
      $region72: #{tpu_custom_call.1} parent=5 // pred_fallthru
        _
    $region6: #{tpu_custom_call.1} parent=1 // loop_footer
      %s24 = sadd.s32 1, %s20
    $region7: #{tpu_custom_call.1} parent=1 // loop_footer_branch
      %19 = sbr.rel target = $region3
    $region8: #{tpu_custom_call.1} parent=1 // loop_exit
      _
    %2432 = vsyncpa [#allocation3], 1
    %s2433 = scalar_lea.sflag [#allocation3], 1
    %2434 = vsyncpa %s2433, 1

</llo_original>
